<compile_context>
chip_gen: v7x
topology: tpu7x:2x2x1
jax: 0.10.0
libtpu: 0.0.40
codegen_flags: <defaults>
</compile_context>

<pallas_src>
import functools

import jax
import jax.numpy as jnp
from jax.experimental import pallas as pl
from jax.experimental.pallas import tpu as pltpu

EPS = 1e-5  # InstanceNorm2d default eps


def _conv_attn_kernel(x_ref, masks_ref, wc_ref, wq_ref, bq_ref, wk_ref, bk_ref,
                      wv_ref, bv_ref, gamma_ref, o_ref, h_scr, k_scr, v_scr,
                      *, W, TQ):
    qt = pl.program_id(1)

    # ---------------- per-batch prologue: conv + InstanceNorm + ReLU + K/V ----
    @pl.when(qt == 0)
    def _prologue():
        x = x_ref[0].astype(jnp.float32)          # (C, HW)
        m = masks_ref[...]                        # (4, HW) f32 in {0,1}
        top = m[0:1] != 0.0                       # row == 0
        bot = m[1:2] != 0.0                       # row == H-1
        left = m[2:3] != 0.0                      # col == 0
        right = m[3:4] != 0.0                     # col == W-1

        # Reflection-padded vertical neighbours (roll wrap values are masked out
        # with a single vselect per boundary).
        up_v = jnp.roll(x, W, axis=1)             # value from row r-1
        dn_v = jnp.roll(x, -W, axis=1)            # value from row r+1
        rows = (jnp.where(top, dn_v, up_v),       # dr = -1 (row -1 -> row 1)
                x,                                # dr =  0
                jnp.where(bot, up_v, dn_v))       # dr = +1 (row H -> row H-2)

        # 3 fused matmuls (K = 3C) instead of 9 (K = C): per row shift, stack the
        # three column-shifted operands along the contraction axis.
        acc = None
        for di in range(3):
            r = rows[di]
            lf = jnp.roll(r, 1, axis=1)           # value from col c-1
            rt = jnp.roll(r, -1, axis=1)          # value from col c+1
            stacked = jnp.concatenate(
                [jnp.where(left, rt, lf),         # dc = -1
                 r,                               # dc =  0
                 jnp.where(right, lf, rt)],       # dc = +1
                axis=0).astype(jnp.bfloat16)      # (3C, HW) bf16
            part = jnp.dot(wc_ref[di], stacked,
                           preferred_element_type=jnp.float32)      # (C, HW) f32
            acc = part if acc is None else acc + part

        # InstanceNorm2d (affine=False, biased variance) + ReLU, in f32.
        mean = jnp.mean(acc, axis=1, keepdims=True)
        var = jnp.mean(jnp.square(acc - mean), axis=1, keepdims=True)
        h = jnp.maximum((acc - mean) * jax.lax.rsqrt(var + EPS), 0.0)

        h_scr[...] = h
        hb = h.astype(jnp.bfloat16)
        k_scr[...] = (jnp.dot(wk_ref[...], hb,
                              preferred_element_type=jnp.float32)
                      + bk_ref[...]).astype(jnp.bfloat16)            # (C8p, HW)
        v_scr[...] = (jnp.dot(wv_ref[...], hb,
                              preferred_element_type=jnp.float32)
                      + bv_ref[...]).astype(jnp.bfloat16)            # (C, HW)

    # ---------------- attention for this query tile (O(TQ*HW) memory) --------
    start = pl.multiple_of(qt * TQ, TQ)
    h_t = h_scr[:, pl.ds(start, TQ)]                                 # (C, TQ) f32
    q_t = (jnp.dot(wq_ref[...], h_t.astype(jnp.bfloat16),
                   preferred_element_type=jnp.float32) + bq_ref[...])
    q_b = q_t.astype(jnp.bfloat16)                                   # (C8p, TQ)

    # energy^T: (HW, TQ) = K^T @ Q, contracting the channel axis directly
    # (bf16 operands, f32 accumulation, no explicit transpose).
    energy = jax.lax.dot_general(k_scr[...], q_b, (((0,), (0,)), ((), ())),
                                 preferred_element_type=jnp.float32)
    energy = energy - jnp.max(energy, axis=0, keepdims=True)
    p = jnp.exp(energy)                                              # (HW, TQ) f32
    denom = jnp.sum(p, axis=0, keepdims=True)                        # (1, TQ) f32

    # Deferred normalization: V @ p first (bf16 MXU), then scale by 1/denom.
    out_un = jnp.dot(v_scr[...], p.astype(jnp.bfloat16),
                     preferred_element_type=jnp.float32)             # (C, TQ)
    inv = pl.reciprocal(denom, approx=True)                          # (1, TQ)
    o_ref[0] = gamma_ref[0] * (out_un * inv) + h_t


def conv_attn_block(x_nchw, params):
    """Forward pass of ConvAttnBlock. Input/output in NCHW (PyTorch convention)."""
    B, C, H, W = x_nchw.shape
    HW = H * W
    if C < 8:
        raise ValueError("dim must be >= 8 (SelfAttention uses dim // 8 channels)")
    C8 = C // 8
    C8p = ((C8 + 7) // 8) * 8          # pad q/k channels to a multiple of 8

    if HW % 128 == 0:
        TQ = 128                       # safe on every MXU generation
    else:
        # TODO(synk): pad HW to a multiple of 128 (mask padded keys / IN stats)
        # instead of materializing a full (HW, HW) energy tile on odd sizes.
        TQ = HW
    QT = HW // TQ

    # Input in lane-dense (B, C, HW) layout, bf16 (halves DMA; conv operands are
    # bf16 anyway).
    x_flat = x_nchw.reshape(B, C, HW).astype(jnp.bfloat16)

    # Boundary masks for in-kernel reflection padding, packed into one input.
    pos = jnp.arange(HW, dtype=jnp.int32)
    row = pos // W
    col = pos % W
    masks = jnp.stack([(row == 0), (row == H - 1), (col == 0), (col == W - 1)],
                      axis=0).astype(jnp.float32)                    # (4, HW)

    # 3x3 conv weight, fused per row-shift: (3, C, 3C) where the 3C axis is
    # [dc=-1 | dc=0 | dc=+1] blocks of input channels (matches in-kernel stack).
    wc = jnp.transpose(params["w_conv"], (2, 0, 3, 1)).reshape(3, C, 3 * C)
    wc = wc.astype(jnp.bfloat16)

    # q/k weights zero-padded to C8p output channels (extra channels contribute 0).
    wq = jnp.zeros((C8p, C), jnp.float32).at[:C8].set(params["wq"].reshape(C8, C))
    wk = jnp.zeros((C8p, C), jnp.float32).at[:C8].set(params["wk"].reshape(C8, C))
    bq = jnp.zeros((C8p, 1), jnp.float32).at[:C8, 0].set(params["bq"])
    bk = jnp.zeros((C8p, 1), jnp.float32).at[:C8, 0].set(params["bk"])
    wv = params["wv"].reshape(C, C).astype(jnp.bfloat16)
    bv = params["bv"].reshape(C, 1).astype(jnp.float32)
    gamma = params["gamma"].reshape(1).astype(jnp.float32)

    kernel = functools.partial(_conv_attn_kernel, W=W, TQ=TQ)

    const2 = lambda b, qt: (0, 0)
    const3 = lambda b, qt: (0, 0, 0)

    # VMEM budget (double-buffered inputs + scratch + largest temporaries), with
    # headroom; capped at 48 MiB so it is safe on v7x (64 MiB physical VMEM).
    f32b, bf16b = 4, 2
    need = (2 * C * HW * bf16b                      # x tile
            + 2 * 4 * HW * f32b                     # masks
            + 2 * 3 * C * 3 * C * bf16b             # fused conv weights
            + 2 * 2 * (C8p * C * bf16b + C8p * f32b)   # wq/bq, wk/bk
            + 2 * (C * C * bf16b + C * f32b)        # wv/bv
            + C * HW * f32b + C8p * HW * bf16b + C * HW * bf16b   # h/K/V scratch
            + 2 * C * TQ * f32b                     # output tile
            + 8 * C * HW * f32b                     # prologue roll/select temps
            + 3 * C * HW * bf16b                    # stacked conv operand
            + TQ * HW * (f32b + f32b + bf16b))      # energy, p, p_bf16
    vmem_limit = int(min(max(2 * need, 32 * 1024 * 1024), 48 * 1024 * 1024))

    out = pl.pallas_call(
        kernel,
        out_shape=jax.ShapeDtypeStruct((B, C, HW), jnp.float32),
        grid_spec=pltpu.PrefetchScalarGridSpec(
            num_scalar_prefetch=0,
            grid=(B, QT),
            in_specs=[
                pl.BlockSpec((1, C, HW), lambda b, qt: (b, 0, 0)),   # x (per batch)
                pl.BlockSpec((4, HW), const2),                        # packed masks
                pl.BlockSpec((3, C, 3 * C), const3),                  # fused conv W
                pl.BlockSpec((C8p, C), const2),                       # Wq
                pl.BlockSpec((C8p, 1), const2),                       # bq
                pl.BlockSpec((C8p, C), const2),                       # Wk
                pl.BlockSpec((C8p, 1), const2),                       # bk
                pl.BlockSpec((C, C), const2),                         # Wv
                pl.BlockSpec((C, 1), const2),                         # bv
                pl.BlockSpec(memory_space=pltpu.MemorySpace.SMEM),    # gamma
            ],
            out_specs=pl.BlockSpec((1, C, TQ), lambda b, qt: (b, 0, qt)),
            scratch_shapes=[
                pltpu.VMEM((C, HW), jnp.float32),     # h = ReLU(IN(conv(x)))
                pltpu.VMEM((C8p, HW), jnp.bfloat16),  # K (bf16)
                pltpu.VMEM((C, HW), jnp.bfloat16),    # V (bf16)
            ],
        ),
        compiler_params=pltpu.CompilerParams(
            dimension_semantics=("parallel", "arbitrary"),
            vmem_limit_bytes=vmem_limit,
        ),
    )(x_flat, masks, wc, wq.astype(jnp.bfloat16), bq,
      wk.astype(jnp.bfloat16), bk, wv, bv, gamma)

    # (B, C, HW) -> NCHW is a pure reshape (no transpose needed).
    return out.reshape(B, C, H, W)


def reference(x_nchw, params):
    """Pure-JAX (f32) reference of the same forward pass."""
    B, C, H, W = x_nchw.shape
    HW = H * W
    C8 = C // 8
    xpad = jnp.pad(x_nchw, ((0, 0), (0, 0), (1, 1), (1, 1)), mode="reflect")
    cols = [xpad[:, :, di:di + H, dj:dj + W] for di in range(3) for dj in range(3)]
    patches = jnp.stack(cols, axis=2).reshape(B, C * 9, HW).transpose(0, 2, 1)
    wc = params["w_conv"].reshape(C, C * 9).T
    h = jnp.einsum("bpk,kc->bpc", patches, wc)
    mean = h.mean(axis=1, keepdims=True)
    var = ((h - mean) ** 2).mean(axis=1, keepdims=True)
    h = (h - mean) / jnp.sqrt(var + EPS)
    h = jnp.maximum(h, 0.0)
    q = h @ params["wq"].reshape(C8, C).T + params["bq"].reshape(1, 1, C8)
    k = h @ params["wk"].reshape(C8, C).T + params["bk"].reshape(1, 1, C8)
    v = h @ params["wv"].reshape(C, C).T + params["bv"].reshape(1, 1, C)
    energy = jnp.einsum("bid,bjd->bij", q, k)
    attn = jax.nn.softmax(energy, axis=-1)
    out = jnp.einsum("bij,bjc->bic", attn, v)
    y = params["gamma"].reshape(1, 1, 1) * out + h
    return y.transpose(0, 2, 1).reshape(B, C, H, W)


if __name__ == "__main__":
    B, C, H, W = 2, 8, 16, 16   # dim must be >= 8 so that dim // 8 >= 1
    C8 = C // 8
    keys = jax.random.split(jax.random.PRNGKey(0), 8)
    x = jax.random.normal(keys[0], (B, C, H, W), jnp.float32)

    # Deterministic parameter init (shapes follow the module's __init__).
    # NOTE: the module inits gamma to 0 (attention branch would be a no-op);
    # we use a nonzero gamma so the attention path is actually exercised.
    params = {
        "w_conv": 0.1 * jax.random.normal(keys[1], (C, C, 3, 3), jnp.float32),
        "wq": 0.1 * jax.random.normal(keys[2], (C8, C, 1, 1), jnp.float32),
        "bq": 0.1 * jax.random.normal(keys[3], (C8,), jnp.float32),
        "wk": 0.1 * jax.random.normal(keys[4], (C8, C, 1, 1), jnp.float32),
        "bk": 0.1 * jax.random.normal(keys[5], (C8,), jnp.float32),
        "wv": 0.1 * jax.random.normal(keys[6], (C, C, 1, 1), jnp.float32),
        "bv": 0.1 * jax.random.normal(keys[7], (C,), jnp.float32),
        "gamma": jnp.array([0.5], jnp.float32),
    }

    y = jax.block_until_ready(conv_attn_block(x, params))
    y_ref = reference(x, params)

    assert y.shape == (B, C, H, W)
    max_err = float(jnp.max(jnp.abs(y - y_ref)))
    # bf16 MXU operands (f32 accumulate) + approx reciprocal => looser tolerance.
    assert jnp.allclose(y, y_ref, atol=5e-2, rtol=5e-2), (
        f"mismatch vs JAX reference (max abs err {max_err})")

    print("KERNEL_OK")
</pallas_src>

<mosaic_0001>
module attributes {stable_mosaic.version = 11 : i64} {
  func.func @_conv_attn_kernel(%arg0: i32, %arg1: i32, %arg2: memref<1x8x256xbf16, #tpu.memory_space<vmem>>, %arg3: memref<4x256xf32, #tpu.memory_space<vmem>>, %arg4: memref<3x8x24xbf16, #tpu.memory_space<vmem>>, %arg5: memref<8x8xbf16, #tpu.memory_space<vmem>>, %arg6: memref<8x1xf32, #tpu.memory_space<vmem>>, %arg7: memref<8x8xbf16, #tpu.memory_space<vmem>>, %arg8: memref<8x1xf32, #tpu.memory_space<vmem>>, %arg9: memref<8x8xbf16, #tpu.memory_space<vmem>>, %arg10: memref<8x1xf32, #tpu.memory_space<vmem>>, %arg11: memref<1xf32, #tpu.memory_space<smem>>, %arg12: memref<1x8x128xf32, #tpu.memory_space<vmem>>, %arg13: memref<8x256xf32, #tpu.memory_space<vmem>>, %arg14: memref<8x256xbf16, #tpu.memory_space<vmem>>, %arg15: memref<8x256xbf16, #tpu.memory_space<vmem>>) attributes {dimension_semantics = [#tpu.dimension_semantics<parallel>, #tpu.dimension_semantics<arbitrary>], iteration_bounds = array<i64: 2, 2>, scalar_prefetch = 0 : i64, scratch_operands = 3 : i64, tpu.core_type = #tpu.core_type<tc>, window_params = [{transform_indices = @transform_0, window_bounds = array<i64: 1, 8, 256>}, {pipeline_mode = #tpu.pipeline_mode<synchronous>, transform_indices = @transform_1, window_bounds = array<i64: 4, 256>}, {pipeline_mode = #tpu.pipeline_mode<synchronous>, transform_indices = @transform_2, window_bounds = array<i64: 3, 8, 24>}, {pipeline_mode = #tpu.pipeline_mode<synchronous>, transform_indices = @transform_3, window_bounds = array<i64: 8, 8>}, {pipeline_mode = #tpu.pipeline_mode<synchronous>, transform_indices = @transform_4, window_bounds = array<i64: 8, 1>}, {pipeline_mode = #tpu.pipeline_mode<synchronous>, transform_indices = @transform_5, window_bounds = array<i64: 8, 8>}, {pipeline_mode = #tpu.pipeline_mode<synchronous>, transform_indices = @transform_6, window_bounds = array<i64: 8, 1>}, {pipeline_mode = #tpu.pipeline_mode<synchronous>, transform_indices = @transform_7, window_bounds = array<i64: 8, 8>}, {pipeline_mode = #tpu.pipeline_mode<synchronous>, transform_indices = @transform_8, window_bounds = array<i64: 8, 1>}, {transform_indices = @transform_9, window_bounds = array<i64: 1>}, {transform_indices = @transform_10, window_bounds = array<i64: 1, 8, 128>}]} {
    %c0_i32 = arith.constant 0 : i32
    %0 = arith.cmpi eq, %arg1, %c0_i32 : i32
    %1 = arith.extui %0 : i1 to i32
    %c0_i32_0 = arith.constant 0 : i32
    %2 = arith.cmpi ne, %1, %c0_i32_0 : i32
    scf.if %2 {
      %c0_17 = arith.constant 0 : index
      %c0_18 = arith.constant 0 : index
      %c0_19 = arith.constant 0 : index
      %36 = vector.load %arg2[%c0_17, %c0_18, %c0_19] : memref<1x8x256xbf16, #tpu.memory_space<vmem>>, vector<1x8x256xbf16>
      %37 = vector.shape_cast %36 : vector<1x8x256xbf16> to vector<8x256xbf16>
      %38 = arith.extf %37 : vector<8x256xbf16> to vector<8x256xf32>
      %c0_20 = arith.constant 0 : index
      %c0_21 = arith.constant 0 : index
      %39 = vector.load %arg3[%c0_20, %c0_21] : memref<4x256xf32, #tpu.memory_space<vmem>>, vector<4x256xf32>
      %40 = vector.extract_strided_slice %39 {offsets = [0, 0], sizes = [1, 256], strides = [1, 1]} : vector<4x256xf32> to vector<1x256xf32>
      %cst_22 = arith.constant 0.000000e+00 : f32
      %41 = vector.broadcast %cst_22 : f32 to vector<1x256xf32>
      %42 = arith.cmpf one, %40, %41 : vector<1x256xf32>
      %43 = vector.extract_strided_slice %39 {offsets = [1, 0], sizes = [1, 256], strides = [1, 1]} : vector<4x256xf32> to vector<1x256xf32>
      %cst_23 = arith.constant 0.000000e+00 : f32
      %44 = vector.broadcast %cst_23 : f32 to vector<1x256xf32>
      %45 = arith.cmpf one, %43, %44 : vector<1x256xf32>
      %46 = vector.extract_strided_slice %39 {offsets = [2, 0], sizes = [1, 256], strides = [1, 1]} : vector<4x256xf32> to vector<1x256xf32>
      %cst_24 = arith.constant 0.000000e+00 : f32
      %47 = vector.broadcast %cst_24 : f32 to vector<1x256xf32>
      %48 = arith.cmpf one, %46, %47 : vector<1x256xf32>
      %49 = vector.extract_strided_slice %39 {offsets = [3, 0], sizes = [1, 256], strides = [1, 1]} : vector<4x256xf32> to vector<1x256xf32>
      %cst_25 = arith.constant 0.000000e+00 : f32
      %50 = vector.broadcast %cst_25 : f32 to vector<1x256xf32>
      %51 = arith.cmpf one, %49, %50 : vector<1x256xf32>
      %52 = vector.extract_strided_slice %38 {offsets = [0, 240], sizes = [8, 16], strides = [1, 1]} : vector<8x256xf32> to vector<8x16xf32>
      %53 = vector.extract_strided_slice %38 {offsets = [0, 0], sizes = [8, 240], strides = [1, 1]} : vector<8x256xf32> to vector<8x240xf32>
      %54 = tpu.concatenate %52, %53 in 1 : vector<8x16xf32>, vector<8x240xf32> -> vector<8x256xf32>
      %55 = vector.extract_strided_slice %38 {offsets = [0, 16], sizes = [8, 240], strides = [1, 1]} : vector<8x256xf32> to vector<8x240xf32>
      %56 = vector.extract_strided_slice %38 {offsets = [0, 0], sizes = [8, 16], strides = [1, 1]} : vector<8x256xf32> to vector<8x16xf32>
      %57 = tpu.concatenate %55, %56 in 1 : vector<8x240xf32>, vector<8x16xf32> -> vector<8x256xf32>
      %58 = vector.shape_cast %42 : vector<1x256xi1> to vector<1x256xi1>
      %59 = vector.broadcast %58 : vector<1x256xi1> to vector<8x256xi1>
      %60 = arith.select %59, %57, %54 : vector<8x256xi1>, vector<8x256xf32>
      %61 = vector.shape_cast %45 : vector<1x256xi1> to vector<1x256xi1>
      %62 = vector.broadcast %61 : vector<1x256xi1> to vector<8x256xi1>
      %63 = arith.select %62, %54, %57 : vector<8x256xi1>, vector<8x256xf32>
      %64 = vector.extract_strided_slice %60 {offsets = [0, 255], sizes = [8, 1], strides = [1, 1]} : vector<8x256xf32> to vector<8x1xf32>
      %65 = vector.extract_strided_slice %60 {offsets = [0, 0], sizes = [8, 255], strides = [1, 1]} : vector<8x256xf32> to vector<8x255xf32>
      %66 = tpu.concatenate %64, %65 in 1 : vector<8x1xf32>, vector<8x255xf32> -> vector<8x256xf32>
      %67 = vector.extract_strided_slice %60 {offsets = [0, 1], sizes = [8, 255], strides = [1, 1]} : vector<8x256xf32> to vector<8x255xf32>
      %68 = vector.extract_strided_slice %60 {offsets = [0, 0], sizes = [8, 1], strides = [1, 1]} : vector<8x256xf32> to vector<8x1xf32>
      %69 = tpu.concatenate %67, %68 in 1 : vector<8x255xf32>, vector<8x1xf32> -> vector<8x256xf32>
      %70 = vector.shape_cast %48 : vector<1x256xi1> to vector<1x256xi1>
      %71 = vector.broadcast %70 : vector<1x256xi1> to vector<8x256xi1>
      %72 = arith.select %71, %69, %66 : vector<8x256xi1>, vector<8x256xf32>
      %73 = vector.shape_cast %51 : vector<1x256xi1> to vector<1x256xi1>
      %74 = vector.broadcast %73 : vector<1x256xi1> to vector<8x256xi1>
      %75 = arith.select %74, %66, %69 : vector<8x256xi1>, vector<8x256xf32>
      %76 = tpu.concatenate %72, %60, %75 in 0 : vector<8x256xf32>, vector<8x256xf32>, vector<8x256xf32> -> vector<24x256xf32>
      %77 = arith.truncf %76 : vector<24x256xf32> to vector<24x256xbf16>
      %c0_26 = arith.constant 0 : index
      %c0_27 = arith.constant 0 : index
      %c0_28 = arith.constant 0 : index
      %78 = vector.load %arg4[%c0_26, %c0_27, %c0_28] : memref<3x8x24xbf16, #tpu.memory_space<vmem>>, vector<1x8x24xbf16>
      %79 = vector.shape_cast %78 : vector<1x8x24xbf16> to vector<8x24xbf16>
      %cst_29 = arith.constant dense<0.000000e+00> : vector<8x256xf32>
      %80 = tpu.matmul %79, %77, %cst_29 {dimension_numbers = #tpu.dot_dimension_numbers<[1], [0], [0], [1], [0, 0, 1, 1], [], []>} : vector<8x24xbf16>, vector<24x256xbf16>, vector<8x256xf32> -> vector<8x256xf32>
      %81 = vector.extract_strided_slice %38 {offsets = [0, 255], sizes = [8, 1], strides = [1, 1]} : vector<8x256xf32> to vector<8x1xf32>
      %82 = vector.extract_strided_slice %38 {offsets = [0, 0], sizes = [8, 255], strides = [1, 1]} : vector<8x256xf32> to vector<8x255xf32>
      %83 = tpu.concatenate %81, %82 in 1 : vector<8x1xf32>, vector<8x255xf32> -> vector<8x256xf32>
      %84 = vector.extract_strided_slice %38 {offsets = [0, 1], sizes = [8, 255], strides = [1, 1]} : vector<8x256xf32> to vector<8x255xf32>
      %85 = vector.extract_strided_slice %38 {offsets = [0, 0], sizes = [8, 1], strides = [1, 1]} : vector<8x256xf32> to vector<8x1xf32>
      %86 = tpu.concatenate %84, %85 in 1 : vector<8x255xf32>, vector<8x1xf32> -> vector<8x256xf32>
      %87 = vector.shape_cast %48 : vector<1x256xi1> to vector<1x256xi1>
      %88 = vector.broadcast %87 : vector<1x256xi1> to vector<8x256xi1>
      %89 = arith.select %88, %86, %83 : vector<8x256xi1>, vector<8x256xf32>
      %90 = vector.shape_cast %51 : vector<1x256xi1> to vector<1x256xi1>
      %91 = vector.broadcast %90 : vector<1x256xi1> to vector<8x256xi1>
      %92 = arith.select %91, %83, %86 : vector<8x256xi1>, vector<8x256xf32>
      %93 = tpu.concatenate %89, %38, %92 in 0 : vector<8x256xf32>, vector<8x256xf32>, vector<8x256xf32> -> vector<24x256xf32>
      %94 = arith.truncf %93 : vector<24x256xf32> to vector<24x256xbf16>
      %c1 = arith.constant 1 : index
      %c0_30 = arith.constant 0 : index
      %c0_31 = arith.constant 0 : index
      %95 = vector.load %arg4[%c1, %c0_30, %c0_31] : memref<3x8x24xbf16, #tpu.memory_space<vmem>>, vector<1x8x24xbf16>
      %96 = vector.shape_cast %95 : vector<1x8x24xbf16> to vector<8x24xbf16>
      %cst_32 = arith.constant dense<0.000000e+00> : vector<8x256xf32>
      %97 = tpu.matmul %96, %94, %cst_32 {dimension_numbers = #tpu.dot_dimension_numbers<[1], [0], [0], [1], [0, 0, 1, 1], [], []>} : vector<8x24xbf16>, vector<24x256xbf16>, vector<8x256xf32> -> vector<8x256xf32>
      %98 = arith.addf %80, %97 : vector<8x256xf32>
      %99 = vector.extract_strided_slice %63 {offsets = [0, 255], sizes = [8, 1], strides = [1, 1]} : vector<8x256xf32> to vector<8x1xf32>
      %100 = vector.extract_strided_slice %63 {offsets = [0, 0], sizes = [8, 255], strides = [1, 1]} : vector<8x256xf32> to vector<8x255xf32>
      %101 = tpu.concatenate %99, %100 in 1 : vector<8x1xf32>, vector<8x255xf32> -> vector<8x256xf32>
      %102 = vector.extract_strided_slice %63 {offsets = [0, 1], sizes = [8, 255], strides = [1, 1]} : vector<8x256xf32> to vector<8x255xf32>
      %103 = vector.extract_strided_slice %63 {offsets = [0, 0], sizes = [8, 1], strides = [1, 1]} : vector<8x256xf32> to vector<8x1xf32>
      %104 = tpu.concatenate %102, %103 in 1 : vector<8x255xf32>, vector<8x1xf32> -> vector<8x256xf32>
      %105 = vector.shape_cast %48 : vector<1x256xi1> to vector<1x256xi1>
      %106 = vector.broadcast %105 : vector<1x256xi1> to vector<8x256xi1>
      %107 = arith.select %106, %104, %101 : vector<8x256xi1>, vector<8x256xf32>
      %108 = vector.shape_cast %51 : vector<1x256xi1> to vector<1x256xi1>
      %109 = vector.broadcast %108 : vector<1x256xi1> to vector<8x256xi1>
      %110 = arith.select %109, %101, %104 : vector<8x256xi1>, vector<8x256xf32>
      %111 = tpu.concatenate %107, %63, %110 in 0 : vector<8x256xf32>, vector<8x256xf32>, vector<8x256xf32> -> vector<24x256xf32>
      %112 = arith.truncf %111 : vector<24x256xf32> to vector<24x256xbf16>
      %c2 = arith.constant 2 : index
      %c0_33 = arith.constant 0 : index
      %c0_34 = arith.constant 0 : index
      %113 = vector.load %arg4[%c2, %c0_33, %c0_34] : memref<3x8x24xbf16, #tpu.memory_space<vmem>>, vector<1x8x24xbf16>
      %114 = vector.shape_cast %113 : vector<1x8x24xbf16> to vector<8x24xbf16>
      %cst_35 = arith.constant dense<0.000000e+00> : vector<8x256xf32>
      %115 = tpu.matmul %114, %112, %cst_35 {dimension_numbers = #tpu.dot_dimension_numbers<[1], [0], [0], [1], [0, 0, 1, 1], [], []>} : vector<8x24xbf16>, vector<24x256xbf16>, vector<8x256xf32> -> vector<8x256xf32>
      %116 = arith.addf %98, %115 : vector<8x256xf32>
      %cst_36 = arith.constant dense<0.000000e+00> : vector<8xf32>
      %117 = vector.multi_reduction <add>, %116, %cst_36 [1] : vector<8x256xf32> to vector<8xf32>
      %118 = vector.shape_cast %117 : vector<8xf32> to vector<8x1xf32>
      %cst_37 = arith.constant 2.560000e+02 : f32
      %119 = vector.broadcast %cst_37 : f32 to vector<8x1xf32>
      %120 = arith.divf %118, %119 : vector<8x1xf32>
      %121 = vector.broadcast %120 : vector<8x1xf32> to vector<8x256xf32>
      %122 = arith.subf %116, %121 : vector<8x256xf32>
      %123 = arith.mulf %122, %122 : vector<8x256xf32>
      %cst_38 = arith.constant dense<0.000000e+00> : vector<8xf32>
      %124 = vector.multi_reduction <add>, %123, %cst_38 [1] : vector<8x256xf32> to vector<8xf32>
      %125 = vector.shape_cast %124 : vector<8xf32> to vector<8x1xf32>
      %cst_39 = arith.constant 2.560000e+02 : f32
      %126 = vector.broadcast %cst_39 : f32 to vector<8x1xf32>
      %127 = arith.divf %125, %126 : vector<8x1xf32>
      %128 = vector.broadcast %120 : vector<8x1xf32> to vector<8x256xf32>
      %129 = arith.subf %116, %128 : vector<8x256xf32>
      %cst_40 = arith.constant 9.99999974E-6 : f32
      %130 = vector.broadcast %cst_40 : f32 to vector<8x1xf32>
      %131 = arith.addf %127, %130 : vector<8x1xf32>
      %132 = math.rsqrt %131 : vector<8x1xf32>
      %133 = vector.broadcast %132 : vector<8x1xf32> to vector<8x256xf32>
      %134 = arith.mulf %129, %133 : vector<8x256xf32>
      %cst_41 = arith.constant 0.000000e+00 : f32
      %135 = vector.broadcast %cst_41 : f32 to vector<8x256xf32>
      %136 = arith.maximumf %134, %135 : vector<8x256xf32>
      %c0_42 = arith.constant 0 : index
      %c0_43 = arith.constant 0 : index
      %137 = vector.load %arg13[%c0_42, %c0_43] : memref<8x256xf32, #tpu.memory_space<vmem>>, vector<8x256xf32>
      tpu.vector_store %arg13[%c0_42, %c0_43], %136 {strides = array<i32>} : memref<8x256xf32, #tpu.memory_space<vmem>>, vector<8x256xf32>,
      %138 = arith.truncf %136 : vector<8x256xf32> to vector<8x256xbf16>
      %c0_44 = arith.constant 0 : index
      %c0_45 = arith.constant 0 : index
      %139 = vector.load %arg7[%c0_44, %c0_45] : memref<8x8xbf16, #tpu.memory_space<vmem>>, vector<8x8xbf16>
      %cst_46 = arith.constant dense<0.000000e+00> : vector<8x256xf32>
      %140 = tpu.matmul %139, %138, %cst_46 {dimension_numbers = #tpu.dot_dimension_numbers<[1], [0], [0], [1], [0, 0, 1, 1], [], []>} : vector<8x8xbf16>, vector<8x256xbf16>, vector<8x256xf32> -> vector<8x256xf32>
      %c0_47 = arith.constant 0 : index
      %c0_48 = arith.constant 0 : index
      %141 = vector.load %arg8[%c0_47, %c0_48] : memref<8x1xf32, #tpu.memory_space<vmem>>, vector<8x1xf32>
      %142 = vector.broadcast %141 : vector<8x1xf32> to vector<8x256xf32>
      %143 = arith.addf %140, %142 : vector<8x256xf32>
      %144 = arith.truncf %143 : vector<8x256xf32> to vector<8x256xbf16>
      %c0_49 = arith.constant 0 : index
      %c0_50 = arith.constant 0 : index
      %145 = vector.load %arg14[%c0_49, %c0_50] : memref<8x256xbf16, #tpu.memory_space<vmem>>, vector<8x256xbf16>
      tpu.vector_store %arg14[%c0_49, %c0_50], %144 {strides = array<i32>} : memref<8x256xbf16, #tpu.memory_space<vmem>>, vector<8x256xbf16>,
      %c0_51 = arith.constant 0 : index
      %c0_52 = arith.constant 0 : index
      %146 = vector.load %arg9[%c0_51, %c0_52] : memref<8x8xbf16, #tpu.memory_space<vmem>>, vector<8x8xbf16>
      %cst_53 = arith.constant dense<0.000000e+00> : vector<8x256xf32>
      %147 = tpu.matmul %146, %138, %cst_53 {dimension_numbers = #tpu.dot_dimension_numbers<[1], [0], [0], [1], [0, 0, 1, 1], [], []>} : vector<8x8xbf16>, vector<8x256xbf16>, vector<8x256xf32> -> vector<8x256xf32>
      %c0_54 = arith.constant 0 : index
      %c0_55 = arith.constant 0 : index
      %148 = vector.load %arg10[%c0_54, %c0_55] : memref<8x1xf32, #tpu.memory_space<vmem>>, vector<8x1xf32>
      %149 = vector.broadcast %148 : vector<8x1xf32> to vector<8x256xf32>
      %150 = arith.addf %147, %149 : vector<8x256xf32>
      %151 = arith.truncf %150 : vector<8x256xf32> to vector<8x256xbf16>
      %c0_56 = arith.constant 0 : index
      %c0_57 = arith.constant 0 : index
      %152 = vector.load %arg15[%c0_56, %c0_57] : memref<8x256xbf16, #tpu.memory_space<vmem>>, vector<8x256xbf16>
      tpu.vector_store %arg15[%c0_56, %c0_57], %151 {strides = array<i32>} : memref<8x256xbf16, #tpu.memory_space<vmem>>, vector<8x256xbf16>,
    } else {
    }
    %c128_i32 = arith.constant 128 : i32
    %3 = arith.muli %arg1, %c128_i32 : i32
    %4 = tpu.assume_multiple %3, 128 : i32
    %c0 = arith.constant 0 : index
    %5 = arith.index_cast %4 : i32 to index
    %6 = vector.load %arg13[%c0, %5] : memref<8x256xf32, #tpu.memory_space<vmem>>, vector<8x128xf32>
    %c0_1 = arith.constant 0 : index
    %c0_2 = arith.constant 0 : index
    %7 = vector.load %arg5[%c0_1, %c0_2] : memref<8x8xbf16, #tpu.memory_space<vmem>>, vector<8x8xbf16>
    %8 = arith.truncf %6 : vector<8x128xf32> to vector<8x128xbf16>
    %cst = arith.constant dense<0.000000e+00> : vector<8x128xf32>
    %9 = tpu.matmul %7, %8, %cst {dimension_numbers = #tpu.dot_dimension_numbers<[1], [0], [0], [1], [0, 0, 1, 1], [], []>} : vector<8x8xbf16>, vector<8x128xbf16>, vector<8x128xf32> -> vector<8x128xf32>
    %c0_3 = arith.constant 0 : index
    %c0_4 = arith.constant 0 : index
    %10 = vector.load %arg6[%c0_3, %c0_4] : memref<8x1xf32, #tpu.memory_space<vmem>>, vector<8x1xf32>
    %11 = vector.broadcast %10 : vector<8x1xf32> to vector<8x128xf32>
    %12 = arith.addf %9, %11 : vector<8x128xf32>
    %13 = arith.truncf %12 : vector<8x128xf32> to vector<8x128xbf16>
    %c0_5 = arith.constant 0 : index
    %c0_6 = arith.constant 0 : index
    %14 = vector.load %arg14[%c0_5, %c0_6] : memref<8x256xbf16, #tpu.memory_space<vmem>>, vector<8x256xbf16>
    %cst_7 = arith.constant dense<0.000000e+00> : vector<256x128xf32>
    %15 = tpu.matmul %14, %13, %cst_7 {dimension_numbers = #tpu.dot_dimension_numbers<[0], [0], [1], [1], [0, 1, 1, 1], [], []>} : vector<8x256xbf16>, vector<8x128xbf16>, vector<256x128xf32> -> vector<256x128xf32>
    %cst_8 = arith.constant dense<0xFF800000> : vector<128xf32>
    %16 = vector.multi_reduction <maximumf>, %15, %cst_8 [0] : vector<256x128xf32> to vector<128xf32>
    %17 = vector.shape_cast %16 : vector<128xf32> to vector<1x128xf32>
    %18 = vector.broadcast %17 : vector<1x128xf32> to vector<256x128xf32>
    %19 = arith.subf %15, %18 : vector<256x128xf32>
    %20 = math.exp %19 : vector<256x128xf32>
    %cst_9 = arith.constant dense<0.000000e+00> : vector<128xf32>
    %21 = vector.multi_reduction <add>, %20, %cst_9 [0] : vector<256x128xf32> to vector<128xf32>
    %22 = vector.shape_cast %21 : vector<128xf32> to vector<1x128xf32>
    %c0_10 = arith.constant 0 : index
    %c0_11 = arith.constant 0 : index
    %23 = vector.load %arg15[%c0_10, %c0_11] : memref<8x256xbf16, #tpu.memory_space<vmem>>, vector<8x256xbf16>
    %24 = arith.truncf %20 : vector<256x128xf32> to vector<256x128xbf16>
    %cst_12 = arith.constant dense<0.000000e+00> : vector<8x128xf32>
    %25 = tpu.matmul %23, %24, %cst_12 {dimension_numbers = #tpu.dot_dimension_numbers<[1], [0], [0], [1], [0, 0, 1, 1], [], []>} : vector<8x256xbf16>, vector<256x128xbf16>, vector<8x128xf32> -> vector<8x128xf32>
    %26 = tpu.reciprocal %22 {approx = true} : vector<1x128xf32> -> vector<1x128xf32>
    %c0_13 = arith.constant 0 : index
    %27 = memref.load %arg11[%c0_13] : memref<1xf32, #tpu.memory_space<smem>>
    %28 = vector.broadcast %26 : vector<1x128xf32> to vector<8x128xf32>
    %29 = arith.mulf %25, %28 : vector<8x128xf32>
    %30 = vector.broadcast %27 : f32 to vector<8x128xf32>
    %31 = arith.mulf %30, %29 : vector<8x128xf32>
    %32 = arith.addf %31, %6 : vector<8x128xf32>
    %c0_14 = arith.constant 0 : index
    %c0_15 = arith.constant 0 : index
    %c0_16 = arith.constant 0 : index
    %33 = vector.load %arg12[%c0_14, %c0_15, %c0_16] : memref<1x8x128xf32, #tpu.memory_space<vmem>>, vector<1x8x128xf32>
    %34 = vector.shape_cast %33 : vector<1x8x128xf32> to vector<8x128xf32>
    %35 = vector.shape_cast %32 : vector<8x128xf32> to vector<1x8x128xf32>
    tpu.vector_store %arg12[%c0_14, %c0_15, %c0_16], %35 {strides = array<i32>} : memref<1x8x128xf32, #tpu.memory_space<vmem>>, vector<1x8x128xf32>,
    return
  }
  func.func @transform_0(%arg0: i32, %arg1: i32) -> (i32, i32, i32) {
    %c0_i32 = arith.constant 0 : i32
    %c0_i32_0 = arith.constant 0 : i32
    %c0_i32_1 = arith.constant 0 : i32
    return %arg0, %c0_i32, %c0_i32_0 : i32, i32, i32
  }
  func.func @transform_1(%arg0: i32, %arg1: i32) -> (i32, i32) {
    %c0_i32 = arith.constant 0 : i32
    %c0_i32_0 = arith.constant 0 : i32
    %c0_i32_1 = arith.constant 0 : i32
    return %c0_i32, %c0_i32_0 : i32, i32
  }
  func.func @transform_2(%arg0: i32, %arg1: i32) -> (i32, i32, i32) {
    %c0_i32 = arith.constant 0 : i32
    %c0_i32_0 = arith.constant 0 : i32
    %c0_i32_1 = arith.constant 0 : i32
    %c0_i32_2 = arith.constant 0 : i32
    return %c0_i32, %c0_i32_0, %c0_i32_1 : i32, i32, i32
  }
  func.func @transform_3(%arg0: i32, %arg1: i32) -> (i32, i32) {
    %c0_i32 = arith.constant 0 : i32
    %c0_i32_0 = arith.constant 0 : i32
    %c0_i32_1 = arith.constant 0 : i32
    return %c0_i32, %c0_i32_0 : i32, i32
  }
  func.func @transform_4(%arg0: i32, %arg1: i32) -> (i32, i32) {
    %c0_i32 = arith.constant 0 : i32
    %c0_i32_0 = arith.constant 0 : i32
    %c0_i32_1 = arith.constant 0 : i32
    return %c0_i32, %c0_i32_0 : i32, i32
  }
  func.func @transform_5(%arg0: i32, %arg1: i32) -> (i32, i32) {
    %c0_i32 = arith.constant 0 : i32
    %c0_i32_0 = arith.constant 0 : i32
    %c0_i32_1 = arith.constant 0 : i32
    return %c0_i32, %c0_i32_0 : i32, i32
  }
  func.func @transform_6(%arg0: i32, %arg1: i32) -> (i32, i32) {
    %c0_i32 = arith.constant 0 : i32
    %c0_i32_0 = arith.constant 0 : i32
    %c0_i32_1 = arith.constant 0 : i32
    return %c0_i32, %c0_i32_0 : i32, i32
  }
  func.func @transform_7(%arg0: i32, %arg1: i32) -> (i32, i32) {
    %c0_i32 = arith.constant 0 : i32
    %c0_i32_0 = arith.constant 0 : i32
    %c0_i32_1 = arith.constant 0 : i32
    return %c0_i32, %c0_i32_0 : i32, i32
  }
  func.func @transform_8(%arg0: i32, %arg1: i32) -> (i32, i32) {
    %c0_i32 = arith.constant 0 : i32
    %c0_i32_0 = arith.constant 0 : i32
    %c0_i32_1 = arith.constant 0 : i32
    return %c0_i32, %c0_i32_0 : i32, i32
  }
  func.func @transform_9(%arg0: i32, %arg1: i32) -> i32 {
    %c0_i32 = arith.constant 0 : i32
    %c0_i32_0 = arith.constant 0 : i32
    return %c0_i32 : i32
  }
  func.func @transform_10(%arg0: i32, %arg1: i32) -> (i32, i32, i32) {
    %c0_i32 = arith.constant 0 : i32
    %c0_i32_0 = arith.constant 0 : i32
    return %arg0, %c0_i32, %arg1 : i32, i32, i32
  }
}

</mosaic_0001>

<llo_original>
// kernel: tpu_custom_call.1
$region0: #{tpu_custom_call.1}
  #allocation0 [shape = 'u32[]', space=smem, size = 0x4, offset = 0x4, fixed_abs, tag = 'smem constant byte address 0x4 - core index']
  #allocation1 [shape = 'u32[144,128]{1,0:T(1,128)}', space=vmem, size = 0x12000, scoped, tag = 'internal scratch']
  #allocation2 [shape = 'f32[8,256]{1,0:T(8,128)}', space=vmem, size = 0x2000, scoped, tag = 'scratch operand']
  #allocation3 [shape = 'bf16[8,256]{1,0:T(8,128)(2,1)}', space=vmem, size = 0x1000, scoped, tag = 'scratch operand']
  #allocation4 [shape = 'bf16[8,256]{1,0:T(8,128)(2,1)}', space=vmem, size = 0x1000, scoped, tag = 'scratch operand']
  #allocation5 [shape = 'f32[1]{0:T(128)S(6)}', space=smem, size = 0x200, scoped, tag = 'scoped memory for tpu_custom_call.1']
  %s0 = inlined_call_operand.vmem [shape: bf16[2,8,256], index: 0, kind: input, shape index: {}]
  %s1 = inlined_call_operand.hbm [shape: f32[4,256], index: 1, kind: input, shape index: {}]
  %s2 = inlined_call_operand.vmem [shape: bf16[3,8,24], index: 2, kind: input, shape index: {}]
  %s3 = inlined_call_operand.vmem [shape: bf16[8,8], index: 3, kind: input, shape index: {}]
  %s4 = inlined_call_operand.vmem [shape: f32[8,1], index: 4, kind: input, shape index: {}]
  %s5 = inlined_call_operand.vmem [shape: bf16[8,8], index: 5, kind: input, shape index: {}]
  %s6 = inlined_call_operand.vmem [shape: f32[8,1], index: 6, kind: input, shape index: {}]
  %s7 = inlined_call_operand.vmem [shape: bf16[8,8], index: 7, kind: input, shape index: {}]
  %s8 = inlined_call_operand.vmem [shape: f32[8,1], index: 8, kind: input, shape index: {}]
  %s9 = inlined_call_operand.<no memory space> [shape: f32[1], index: 9, kind: input, shape index: {}]
  %s10 = inlined_call_operand.hbm [shape: f32[2,8,256], index: 10, kind: output, shape index: {}]
  %s11 = sld [smem:[#allocation0]]
  $region81: #{tpu_custom_call.1} parent=0
    _
  %s13 = ssub.s32 1, %s11
  %s14 = scalar_select 0, %s13, %s11
  %15 = sst [smem:[#allocation5]] %s9
  $region1: #{tpu_custom_call.1} parent=0
    #allocation6 [shape = 'u8[4096]{0}', space=vmem, size = 0x1000, scoped, tag = 'input window, operand 1, single buffered']
    #allocation7 [shape = 's32[2]{0}', space=sflag, size = 0x8, scoped, tag = 'scoped memory for tpu_custom_call.1']
    #allocation8 [shape = 's32[2]{0}', space=sflag, size = 0x8, scoped, tag = 'scoped memory for tpu_custom_call.1']
    #allocation9 [shape = 'u8[8192]{0}', space=vmem, size = 0x2000, scoped, tag = 'output window, operand 0']
    %16 = vsyncpa [#allocation7], 0
    %17 = vsyncpa [#allocation8], 0
    %s18 = scalar_lea.sflag [#allocation8], 1
    %19 = vsyncpa %s18, 0
    loop: start=0, step=1, limit=6
    $region2: #{tpu_custom_call.1} parent=1 // loop_pre_header
      _
    $region3: #{tpu_custom_call.1} parent=1 // loop_header
      %s21 = sphi 0, %s25
      %p22 = scmp.ge.s32.totalorder %s21, 6
      %s28 = sphi 0, %s40
      %s29 = sphi 0, %s36
      %s30 = sphi 0, %s28
      %s31 = sphi 0, %s29
      %s32 = sphi 0, %s30
      %s33 = sphi 0, %s31
      %s43 = sphi 0, %s45
      %s46 = sphi 0, %s43
      %s47 = sphi 0, %s46
      %s63 = sphi 0, %s47
      %s67 = sphi 0, %s67
      %s69 = sphi 0, %s67
      %s70 = sphi 0, %s69
      %s84 = sphi 0, %s70
      %s88 = sphi 0, %s88
      %s90 = sphi 0, %s88
      %s91 = sphi 0, %s90
      %s105 = sphi 0, %s91
      %s109 = sphi 0, %s109
      %s111 = sphi 0, %s109
      %s112 = sphi 0, %s111
      %s126 = sphi 0, %s112
      %s130 = sphi 0, %s130
      %s132 = sphi 0, %s130
      %s133 = sphi 0, %s132
      %s147 = sphi 0, %s133
      %s151 = sphi 0, %s151
      %s153 = sphi 0, %s151
      %s154 = sphi 0, %s153
      %s168 = sphi 0, %s154
      %s172 = sphi 0, %s172
      %s174 = sphi 0, %s172
      %s175 = sphi 0, %s174
      %s189 = sphi 0, %s175
      %s193 = sphi 0, %s193
      %s195 = sphi 0, %s193
      %s196 = sphi 0, %s195
      %s210 = sphi 0, %s196
      %s214 = sphi 0, %s214
      %s216 = sphi 0, %s214
      %s217 = sphi 0, %s216
      %s231 = sphi 0, %s217
      %s235 = sphi 0, %s235
      %s237 = sphi 0, %s235
      %s238 = sphi 0, %s237
      %s252 = sphi 0, %s238
      %s260 = sphi 0, %s262
      %s263 = sphi 0, %s260
      %s264 = sphi 0, %s263
      %s280 = sphi 0, %s264
    $region4: #{tpu_custom_call.1} parent=1 // loop_header_branch
      %24 = sbr.rel (%p22) target = $region8
    $region5: #{tpu_custom_call.1} parent=1 // loop_body
      %s26 = ssub.s32 %s21, 1
      %s27 = ssub.s32 %s21, 2
      %s34 = sadd.s32 1, %s29
      %p35 = scmp.ge.s32.totalorder %s34, 2
      %s36 = scalar_select %p35, 0, %s34
      %s37 = sadd.s32 1, %s28
      %s38 = scalar_select %p35, %s37, %s28
      %p39 = scmp.ge.s32.totalorder %s38, 2
      %s40 = scalar_select %p39, 0, %s38
      %s41 = ssub.s32 %s28, %s40
      %p42 = scmp.eq.s32.totalorder %s41, 0
      %s44 = sadd.s32 %s43, 1
      %s45 = scalar_select %p42, %s43, %s44
      %p48 = pneg %p42
      %p49 = scmp.eq.s32.totalorder %s21, 3
      %p50 = por %p48, %p49
      %p51 = scmp.ne.s32.totalorder %s43, %s46
      %p52 = scmp.eq.s32.totalorder %s21, 0
      %p53 = por %p51, %p52
      %p54 = scmp.ne.s32.totalorder %s43, %s46
      %p55 = scmp.eq.s32.totalorder %s26, 3
      %p56 = por %p54, %p55
      %p57 = scmp.ne.s32.totalorder %s46, %s47
      %p58 = scmp.eq.s32.totalorder %s26, 0
      %p59 = por %p57, %p58
      %p60 = scmp.ne.s32.totalorder %s46, %s47
      %p61 = scmp.eq.s32.totalorder %s27, 3
      %p62 = por %p60, %p61
      %p64 = scmp.ne.s32.totalorder %s47, %s63
      %p65 = scmp.eq.s32.totalorder %s27, 0
      %p66 = por %p64, %p65
      %s68 = sadd.s32 %s67, 1
      %p71 = scmp.eq.s32.totalorder %s21, 3
      %p72 = scmp.ne.s32.totalorder %s67, %s69
      %p73 = scmp.eq.s32.totalorder %s21, 0
      %p74 = por %p72, %p73
      %p75 = scmp.ne.s32.totalorder %s67, %s69
      %p76 = scmp.eq.s32.totalorder %s26, 3
      %p77 = por %p75, %p76
      %p78 = scmp.ne.s32.totalorder %s69, %s70
      %p79 = scmp.eq.s32.totalorder %s26, 0
      %p80 = por %p78, %p79
      %p81 = scmp.ne.s32.totalorder %s69, %s70
      %p82 = scmp.eq.s32.totalorder %s27, 3
      %p83 = por %p81, %p82
      %p85 = scmp.ne.s32.totalorder %s70, %s84
      %p86 = scmp.eq.s32.totalorder %s27, 0
      %p87 = por %p85, %p86
      %s89 = sadd.s32 %s88, 1
      %p92 = scmp.eq.s32.totalorder %s21, 3
      %p93 = scmp.ne.s32.totalorder %s88, %s90
      %p94 = scmp.eq.s32.totalorder %s21, 0
      %p95 = por %p93, %p94
      %p96 = scmp.ne.s32.totalorder %s88, %s90
      %p97 = scmp.eq.s32.totalorder %s26, 3
      %p98 = por %p96, %p97
      %p99 = scmp.ne.s32.totalorder %s90, %s91
      %p100 = scmp.eq.s32.totalorder %s26, 0
      %p101 = por %p99, %p100
      %p102 = scmp.ne.s32.totalorder %s90, %s91
      %p103 = scmp.eq.s32.totalorder %s27, 3
      %p104 = por %p102, %p103
      %p106 = scmp.ne.s32.totalorder %s91, %s105
      %p107 = scmp.eq.s32.totalorder %s27, 0
      %p108 = por %p106, %p107
      %s110 = sadd.s32 %s109, 1
      %p113 = scmp.eq.s32.totalorder %s21, 3
      %p114 = scmp.ne.s32.totalorder %s109, %s111
      %p115 = scmp.eq.s32.totalorder %s21, 0
      %p116 = por %p114, %p115
      %p117 = scmp.ne.s32.totalorder %s109, %s111
      %p118 = scmp.eq.s32.totalorder %s26, 3
      %p119 = por %p117, %p118
      %p120 = scmp.ne.s32.totalorder %s111, %s112
      %p121 = scmp.eq.s32.totalorder %s26, 0
      %p122 = por %p120, %p121
      %p123 = scmp.ne.s32.totalorder %s111, %s112
      %p124 = scmp.eq.s32.totalorder %s27, 3
      %p125 = por %p123, %p124
      %p127 = scmp.ne.s32.totalorder %s112, %s126
      %p128 = scmp.eq.s32.totalorder %s27, 0
      %p129 = por %p127, %p128
      %s131 = sadd.s32 %s130, 1
      %p134 = scmp.eq.s32.totalorder %s21, 3
      %p135 = scmp.ne.s32.totalorder %s130, %s132
      %p136 = scmp.eq.s32.totalorder %s21, 0
      %p137 = por %p135, %p136
      %p138 = scmp.ne.s32.totalorder %s130, %s132
      %p139 = scmp.eq.s32.totalorder %s26, 3
      %p140 = por %p138, %p139
      %p141 = scmp.ne.s32.totalorder %s132, %s133
      %p142 = scmp.eq.s32.totalorder %s26, 0
      %p143 = por %p141, %p142
      %p144 = scmp.ne.s32.totalorder %s132, %s133
      %p145 = scmp.eq.s32.totalorder %s27, 3
      %p146 = por %p144, %p145
      %p148 = scmp.ne.s32.totalorder %s133, %s147
      %p149 = scmp.eq.s32.totalorder %s27, 0
      %p150 = por %p148, %p149
      %s152 = sadd.s32 %s151, 1
      %p155 = scmp.eq.s32.totalorder %s21, 3
      %p156 = scmp.ne.s32.totalorder %s151, %s153
      %p157 = scmp.eq.s32.totalorder %s21, 0
      %p158 = por %p156, %p157
      %p159 = scmp.ne.s32.totalorder %s151, %s153
      %p160 = scmp.eq.s32.totalorder %s26, 3
      %p161 = por %p159, %p160
      %p162 = scmp.ne.s32.totalorder %s153, %s154
      %p163 = scmp.eq.s32.totalorder %s26, 0
      %p164 = por %p162, %p163
      %p165 = scmp.ne.s32.totalorder %s153, %s154
      %p166 = scmp.eq.s32.totalorder %s27, 3
      %p167 = por %p165, %p166
      %p169 = scmp.ne.s32.totalorder %s154, %s168
      %p170 = scmp.eq.s32.totalorder %s27, 0
      %p171 = por %p169, %p170
      %s173 = sadd.s32 %s172, 1
      %p176 = scmp.eq.s32.totalorder %s21, 3
      %p177 = scmp.ne.s32.totalorder %s172, %s174
      %p178 = scmp.eq.s32.totalorder %s21, 0
      %p179 = por %p177, %p178
      %p180 = scmp.ne.s32.totalorder %s172, %s174
      %p181 = scmp.eq.s32.totalorder %s26, 3
      %p182 = por %p180, %p181
      %p183 = scmp.ne.s32.totalorder %s174, %s175
      %p184 = scmp.eq.s32.totalorder %s26, 0
      %p185 = por %p183, %p184
      %p186 = scmp.ne.s32.totalorder %s174, %s175
      %p187 = scmp.eq.s32.totalorder %s27, 3
      %p188 = por %p186, %p187
      %p190 = scmp.ne.s32.totalorder %s175, %s189
      %p191 = scmp.eq.s32.totalorder %s27, 0
      %p192 = por %p190, %p191
      %s194 = sadd.s32 %s193, 1
      %p197 = scmp.eq.s32.totalorder %s21, 3
      %p198 = scmp.ne.s32.totalorder %s193, %s195
      %p199 = scmp.eq.s32.totalorder %s21, 0
      %p200 = por %p198, %p199
      %p201 = scmp.ne.s32.totalorder %s193, %s195
      %p202 = scmp.eq.s32.totalorder %s26, 3
      %p203 = por %p201, %p202
      %p204 = scmp.ne.s32.totalorder %s195, %s196
      %p205 = scmp.eq.s32.totalorder %s26, 0
      %p206 = por %p204, %p205
      %p207 = scmp.ne.s32.totalorder %s195, %s196
      %p208 = scmp.eq.s32.totalorder %s27, 3
      %p209 = por %p207, %p208
      %p211 = scmp.ne.s32.totalorder %s196, %s210
      %p212 = scmp.eq.s32.totalorder %s27, 0
      %p213 = por %p211, %p212
      %s215 = sadd.s32 %s214, 1
      %p218 = scmp.eq.s32.totalorder %s21, 3
      %p219 = scmp.ne.s32.totalorder %s214, %s216
      %p220 = scmp.eq.s32.totalorder %s21, 0
      %p221 = por %p219, %p220
      %p222 = scmp.ne.s32.totalorder %s214, %s216
      %p223 = scmp.eq.s32.totalorder %s26, 3
      %p224 = por %p222, %p223
      %p225 = scmp.ne.s32.totalorder %s216, %s217
      %p226 = scmp.eq.s32.totalorder %s26, 0
      %p227 = por %p225, %p226
      %p228 = scmp.ne.s32.totalorder %s216, %s217
      %p229 = scmp.eq.s32.totalorder %s27, 3
      %p230 = por %p228, %p229
      %p232 = scmp.ne.s32.totalorder %s217, %s231
      %p233 = scmp.eq.s32.totalorder %s27, 0
      %p234 = por %p232, %p233
      %s236 = sadd.s32 %s235, 1
      %p239 = scmp.eq.s32.totalorder %s21, 3
      %p240 = scmp.ne.s32.totalorder %s235, %s237
      %p241 = scmp.eq.s32.totalorder %s21, 0
      %p242 = por %p240, %p241
      %p243 = scmp.ne.s32.totalorder %s235, %s237
      %p244 = scmp.eq.s32.totalorder %s26, 3
      %p245 = por %p243, %p244
      %p246 = scmp.ne.s32.totalorder %s237, %s238
      %p247 = scmp.eq.s32.totalorder %s26, 0
      %p248 = por %p246, %p247
      %p249 = scmp.ne.s32.totalorder %s237, %s238
      %p250 = scmp.eq.s32.totalorder %s27, 3
      %p251 = por %p249, %p250
      %p253 = scmp.ne.s32.totalorder %s238, %s252
      %p254 = scmp.eq.s32.totalorder %s27, 0
      %p255 = por %p253, %p254
      %s256 = ssub.s32 %s28, %s40
      %s257 = ssub.s32 %s29, %s36
      %s258 = sor.u32 %s256, %s257
      %p259 = scmp.eq.s32.totalorder %s258, 0
      %s261 = sadd.s32 %s260, 1
      %s262 = scalar_select %p259, %s260, %s261
      %p265 = pneg %p259
      %p266 = scmp.eq.s32.totalorder %s21, 3
      %p267 = por %p265, %p266
      %p268 = scmp.ne.s32.totalorder %s260, %s263
      %p269 = scmp.eq.s32.totalorder %s21, 0
      %p270 = por %p268, %p269
      %p271 = scmp.ne.s32.totalorder %s260, %s263
      %p272 = scmp.eq.s32.totalorder %s26, 3
      %p273 = por %p271, %p272
      %p274 = scmp.ne.s32.totalorder %s263, %s264
      %p275 = scmp.eq.s32.totalorder %s26, 0
      %p276 = por %p274, %p275
      %p277 = scmp.ne.s32.totalorder %s263, %s264
      %p278 = scmp.eq.s32.totalorder %s27, 3
      %p279 = por %p277, %p278
      %p281 = scmp.ne.s32.totalorder %s264, %s280
      %p282 = scmp.eq.s32.totalorder %s27, 0
      %p283 = por %p281, %p282
      %p284 = scmp.le.s32.totalorder 1, %s21
      %p285 = scmp.lt.s32.totalorder %s21, 5
      %p286 = pnand %p284, %p285
      %p287 = pneg %p286
      // Predicated region
      $region9: #{tpu_custom_call.1} parent=5 // pred_check
        _
      $region10: #{tpu_custom_call.1} parent=5 // pred_check_branch
        %289 = sbr.rel (%p286) target = $region12
      $region11: #{tpu_custom_call.1} parent=5 // pred_region
        %s290 = ssub.s32 %s21, 1
        // Predicated region
        $region13: #{tpu_custom_call.1} parent=11 // pred_check
          %p291 = pneg %p80
        $region14: #{tpu_custom_call.1} parent=11 // pred_check_branch
          %293 = sbr.rel (%p291) target = $region16
        $region15: #{tpu_custom_call.1} parent=11 // pred_region
          %s295 = ssub.s32 128, 128
          %296 = vsyncadd [#allocation7], %s295
          %s298 = sshll.u32 [#allocation6], 4
          %s299 = int_to_ptr.vmem [resolvable:$true] %s298
          %301 = dma.hbm_to_vmem [thread:$0]  %s1, 128, %s299, [#allocation7]
        $region16: #{tpu_custom_call.1} parent=11 // pred_fallthru
          _
        // Predicated region
        $region17: #{tpu_custom_call.1} parent=11 // pred_check
          %p302 = pneg %p101
        $region18: #{tpu_custom_call.1} parent=11 // pred_check_branch
          %304 = sbr.rel (%p302) target = $region20
        $region19: #{tpu_custom_call.1} parent=11 // pred_region
          _
        $region20: #{tpu_custom_call.1} parent=11 // pred_fallthru
          _
        // Predicated region
        $region21: #{tpu_custom_call.1} parent=11 // pred_check
          %p305 = pneg %p122
        $region22: #{tpu_custom_call.1} parent=11 // pred_check_branch
          %307 = sbr.rel (%p305) target = $region24
        $region23: #{tpu_custom_call.1} parent=11 // pred_region
          _
        $region24: #{tpu_custom_call.1} parent=11 // pred_fallthru
          _
        // Predicated region
        $region25: #{tpu_custom_call.1} parent=11 // pred_check
          %p308 = pneg %p143
        $region26: #{tpu_custom_call.1} parent=11 // pred_check_branch
          %310 = sbr.rel (%p308) target = $region28
        $region27: #{tpu_custom_call.1} parent=11 // pred_region
          _
        $region28: #{tpu_custom_call.1} parent=11 // pred_fallthru
          _
        // Predicated region
        $region29: #{tpu_custom_call.1} parent=11 // pred_check
          %p311 = pneg %p164
        $region30: #{tpu_custom_call.1} parent=11 // pred_check_branch
          %313 = sbr.rel (%p311) target = $region32
        $region31: #{tpu_custom_call.1} parent=11 // pred_region
          _
        $region32: #{tpu_custom_call.1} parent=11 // pred_fallthru
          _
        // Predicated region
        $region33: #{tpu_custom_call.1} parent=11 // pred_check
          %p314 = pneg %p185
        $region34: #{tpu_custom_call.1} parent=11 // pred_check_branch
          %316 = sbr.rel (%p314) target = $region36
        $region35: #{tpu_custom_call.1} parent=11 // pred_region
          _
        $region36: #{tpu_custom_call.1} parent=11 // pred_fallthru
          _
        // Predicated region
        $region37: #{tpu_custom_call.1} parent=11 // pred_check
          %p317 = pneg %p206
        $region38: #{tpu_custom_call.1} parent=11 // pred_check_branch
          %319 = sbr.rel (%p317) target = $region40
        $region39: #{tpu_custom_call.1} parent=11 // pred_region
          _
        $region40: #{tpu_custom_call.1} parent=11 // pred_fallthru
          _
        // Predicated region
        $region41: #{tpu_custom_call.1} parent=11 // pred_check
          %p320 = pneg %p227
        $region42: #{tpu_custom_call.1} parent=11 // pred_check_branch
          %322 = sbr.rel (%p320) target = $region44
        $region43: #{tpu_custom_call.1} parent=11 // pred_region
          _
        $region44: #{tpu_custom_call.1} parent=11 // pred_fallthru
          _
        // Predicated region
        $region45: #{tpu_custom_call.1} parent=11 // pred_check
          %p323 = pneg %p248
        $region46: #{tpu_custom_call.1} parent=11 // pred_check_branch
          %325 = sbr.rel (%p323) target = $region48
        $region47: #{tpu_custom_call.1} parent=11 // pred_region
          _
        $region48: #{tpu_custom_call.1} parent=11 // pred_fallthru
          _
      $region12: #{tpu_custom_call.1} parent=5 // pred_fallthru
        _
      %p326 = scmp.lt.s32.totalorder %s21, 4
      // Predicated region
      $region49: #{tpu_custom_call.1} parent=5 // pred_check
        %p327 = pneg %p326
      $region50: #{tpu_custom_call.1} parent=5 // pred_check_branch
        %329 = sbr.rel (%p327) target = $region52
      $region51: #{tpu_custom_call.1} parent=5 // pred_region
        // Predicated region
        $region53: #{tpu_custom_call.1} parent=51 // pred_check
          %p330 = pneg %p53
        $region54: #{tpu_custom_call.1} parent=51 // pred_check_branch
          %332 = sbr.rel (%p330) target = $region56
        $region55: #{tpu_custom_call.1} parent=51 // pred_region
          %p333 = scmp.lt.s32.totalorder %s28, 1
          %s334 = scalar_select %p333, %s28, 1
          %s335 = smul.addr %s334, 2
          %s336 = smul.addr %s335, 4
          %s337 = scalar_lea.vmem %s0, %s336
        $region56: #{tpu_custom_call.1} parent=51 // pred_fallthru
          _
      $region52: #{tpu_custom_call.1} parent=5 // pred_fallthru
        _
      %p338 = scmp.le.s32.totalorder 1, %s21
      %p339 = scmp.lt.s32.totalorder %s21, 5
      %p340 = pnand %p338, %p339
      %p341 = pneg %p340
      // Predicated region
      $region57: #{tpu_custom_call.1} parent=5 // pred_check
        _
      $region58: #{tpu_custom_call.1} parent=5 // pred_check_branch
        %343 = sbr.rel (%p340) target = $region60
      $region59: #{tpu_custom_call.1} parent=5 // pred_region
        %s344 = ssub.s32 %s21, 1
        // Predicated region
        $region61: #{tpu_custom_call.1} parent=59 // pred_check
          %p345 = pneg %p80
        $region62: #{tpu_custom_call.1} parent=59 // pred_check_branch
          %347 = sbr.rel (%p345) target = $region64
        $region63: #{tpu_custom_call.1} parent=59 // pred_region
          %348 = dma.done [#allocation7], 128
        $region64: #{tpu_custom_call.1} parent=59 // pred_fallthru
          _
        %p349 = scmp.lt.s32.totalorder %s30, 1
        %s350 = scalar_select %p349, %s30, 1
        %s351 = smul.addr %s350, 2
        %s352 = smul.addr %s351, 4
        %s353 = scalar_lea.vmem %s0, %s352
        %p354 = pneg %p59
        %p355 = pneg %p56
        %p356 = pneg %p80
        %p357 = pneg %p77
        %p358 = pneg %p101
        %p359 = pneg %p98
        %p360 = pneg %p122
        %p361 = pneg %p119
        %p362 = pneg %p143
        %p363 = pneg %p140
        %p364 = pneg %p164
        %p365 = pneg %p161
        %p366 = pneg %p185
        %p367 = pneg %p182
        %p368 = pneg %p206
        %p369 = pneg %p203
        %p370 = pneg %p227
        %p371 = pneg %p224
        %p372 = pneg %p248
        %p373 = pneg %p245
        %p374 = pneg %p276
        %p375 = pneg %p273
        %s376 = sand.u32 %s263, 1
        %s377 = scalar_lea.sflag [#allocation8], %s376
        %s378 = sand.u32 %s263, 1
        %s379 = smul.addr %s378, 8
        %s380 = scalar_lea.vmem [#allocation9], %s379
        %p381 = scmp.lt.s32.totalorder %s30, 1
        %s382 = scalar_select %p381, %s30, 1
        %s383 = smul.addr %s382, 2
        %s384 = smul.addr %s383, 4
        %s385 = scalar_lea.vmem %s0, %s384
        %p387 = scmp.eq.s32.totalorder %s31, 0
        // Predicated region
        $region65: #{tpu_custom_call.1} parent=59 // pred_check
          %p388 = pneg %p387
        $region66: #{tpu_custom_call.1} parent=59 // pred_check_branch
          %390 = sbr.rel (%p388) target = $region68
        $region67: #{tpu_custom_call.1} parent=59 // pred_region
          %v391 = vld [vmem:[%s385] sm:$0xff]
          %v392 = vunpack.c.l.bf16 %v391
          %v393 = vunpack.c.h.bf16 %v391
          %v394 = vld [vmem:[#allocation6] sm:$0xff]
          %vm395 = vcmp.ne.f32.partialorder %v394, 0.0
          %397 = vrot.lane.b32.xlu0 %v393, 16
          %v398 = vpop.permute.xlu0 %397
          %401 = vrot.lane.b32.xlu0 %v392, 16
          %v402 = vpop.permute.xlu0 %401
          %vm403 = vcmask 130048
          %v404 = vsel %vm403, %v402, %v398
          %v407 = vsel %vm403, %v398, %v402
          %408 = vrot.lane.b32.xlu0 %v392, 112
          %v409 = vpop.permute.xlu0 %408
          %410 = vrot.lane.b32.xlu0 %v393, 112
          %v411 = vpop.permute.xlu0 %410
          %vm412 = vcmask 916480
          %v413 = vsel %vm412, %v409, %v411
          %v417 = vsel %vm412, %v411, %v409
          %v418 = vsel %vm395, 1, 0
          %v419 = vlaneseq
          %v420 = vshrl.u32 %v419, 7
          %v421 = vsub.s32 0, %v420
          %v422 = vrot.slane %v418, %v421
          %v423 = vlaneseq
          %v424 = vshrl.u32 %v423, 7
          %v425 = vsub.s32 4, %v424
          %v426 = vrot.slane %v418, %v425
          %v427 = vlaneseq
          %v428 = vshrl.u32 %v427, 7
          %v429 = vsub.s32 0, %v428
          %v430 = vrot.slane %v422, %v429
          %v431 = vlaneseq
          %v432 = vshrl.u32 %v431, 7
          %v433 = vsub.s32 0, %v432
          %v434 = vrot.slane %v426, %v433
          %vm435 = vcmp.eq.s32.totalorder %v430, 1
          %vm436 = vcmp.eq.s32.totalorder %v434, 1
          %v437 = vsel %vm435, %v413, %v407
          %v438 = vsel %vm436, %v417, %v404
          %v439 = vlaneseq
          %v440 = vshrl.u32 %v439, 7
          %v441 = vsub.s32 1, %v440
          %v442 = vrot.slane %v418, %v441
          %v443 = vlaneseq
          %v444 = vshrl.u32 %v443, 7
          %v445 = vsub.s32 5, %v444
          %v446 = vrot.slane %v418, %v445
          %v447 = vlaneseq
          %v448 = vshrl.u32 %v447, 7
          %v449 = vsub.s32 1, %v448
          %v450 = vrot.slane %v442, %v449
          %v451 = vlaneseq
          %v452 = vshrl.u32 %v451, 7
          %v453 = vsub.s32 1, %v452
          %v454 = vrot.slane %v446, %v453
          %vm455 = vcmp.eq.s32.totalorder %v450, 1
          %vm456 = vcmp.eq.s32.totalorder %v454, 1
          %v457 = vsel %vm455, %v407, %v413
          %v458 = vsel %vm456, %v404, %v417
          %460 = vrot.lane.b32.xlu0 %v438, 1
          %v461 = vpop.permute.xlu0 %460
          %464 = vrot.lane.b32.xlu0 %v437, 1
          %v465 = vpop.permute.xlu0 %464
          %vm466 = vcmask 7168
          %v467 = vsel %vm466, %v465, %v461
          %v470 = vsel %vm466, %v461, %v465
          %471 = vrot.lane.b32.xlu0 %v437, 127
          %v472 = vpop.permute.xlu0 %471
          %473 = vrot.lane.b32.xlu0 %v438, 127
          %v474 = vpop.permute.xlu0 %473
          %vm475 = vcmask 1039360
          %v476 = vsel %vm475, %v472, %v474
          %v480 = vsel %vm475, %v474, %v472
          %v481 = vlaneseq
          %v482 = vshrl.u32 %v481, 7
          %v483 = vsub.s32 2, %v482
          %v484 = vrot.slane %v418, %v483
          %v485 = vlaneseq
          %v486 = vshrl.u32 %v485, 7
          %v487 = vsub.s32 6, %v486
          %v488 = vrot.slane %v418, %v487
          %v489 = vlaneseq
          %v490 = vshrl.u32 %v489, 7
          %v491 = vsub.s32 2, %v490
          %v492 = vrot.slane %v484, %v491
          %v493 = vlaneseq
          %v494 = vshrl.u32 %v493, 7
          %v495 = vsub.s32 2, %v494
          %v496 = vrot.slane %v488, %v495
          %vm497 = vcmp.eq.s32.totalorder %v492, 1
          %vm498 = vcmp.eq.s32.totalorder %v496, 1
          %v499 = vsel %vm497, %v476, %v470
          %v500 = vsel %vm498, %v480, %v467
          %v501 = vlaneseq
          %v502 = vshrl.u32 %v501, 7
          %v503 = vsub.s32 3, %v502
          %v504 = vrot.slane %v418, %v503
          %v505 = vlaneseq
          %v506 = vshrl.u32 %v505, 7
          %v507 = vsub.s32 7, %v506
          %v508 = vrot.slane %v418, %v507
          %v509 = vlaneseq
          %v510 = vshrl.u32 %v509, 7
          %v511 = vsub.s32 3, %v510
          %v512 = vrot.slane %v504, %v511
          %v513 = vlaneseq
          %v514 = vshrl.u32 %v513, 7
          %v515 = vsub.s32 3, %v514
          %v516 = vrot.slane %v508, %v515
          %vm517 = vcmp.eq.s32.totalorder %v512, 1
          %vm518 = vcmp.eq.s32.totalorder %v516, 1
          %v519 = vsel %vm517, %v470, %v476
          %v520 = vsel %vm518, %v467, %v480
          %v521 = vpack.c.bf16 %v437, %v499
          %v522 = vpack.c.bf16 %v438, %v500
          %v523 = vpack.c.bf16 %v519, %v519
          %v524 = vpack.c.bf16 %v520, %v520
          %v525 = vld [vmem:[%s2] sm:$0xf]
          %526 = vrot.lane.b32.xlu0 %v393, 1
          %v527 = vpop.permute.xlu0 %526
          %529 = vrot.lane.b32.xlu0 %v392, 1
          %v530 = vpop.permute.xlu0 %529
          %v531 = vsel %vm466, %v530, %v527
          %v534 = vsel %vm466, %v527, %v530
          %535 = vrot.lane.b32.xlu0 %v392, 127
          %v536 = vpop.permute.xlu0 %535
          %537 = vrot.lane.b32.xlu0 %v393, 127
          %v538 = vpop.permute.xlu0 %537
          %v539 = vsel %vm475, %v536, %v538
          %v543 = vsel %vm475, %v538, %v536
          %v544 = vsel %vm497, %v539, %v534
          %v545 = vsel %vm498, %v543, %v531
          %v546 = vsel %vm517, %v534, %v539
          %v547 = vsel %vm518, %v531, %v543
          %v548 = vpack.c.bf16 %v392, %v544
          %v549 = vpack.c.bf16 %v393, %v545
          %v550 = vpack.c.bf16 %v546, %v546
          %v551 = vpack.c.bf16 %v547, %v547
          %s552 = scalar_lea.vmem %s2, 4
          %v553 = vld [vmem:[%s552] sm:$0xf]
          %vm554 = vcmask 195584
          %v556 = vsel %vm554, %v553, 0
          %vm558 = vcmask 1043456
          %v560 = vsel %vm558, %v550, 0
          %v563 = vsel %vm558, %v551, 0
          %565 = vmatprep.subr.bf16.mxu0 %v549
          %566 = vmatpush1.bf16.msra.mxu0 %v548
          %567 = vmatprep.subr.bf16.mxu0 %v563
          %568 = vmatpush1.bf16.msra.mxu0 %v560
          %569 = vmatprep.subr.bf16.mxu0 0
          %570 = vmatpush1.bf16.msra.mxu0 0
          %571 = vmatprep.subr.bf16.mxu0 0
          %572 = vmatpush1.bf16.msra.mxu0 0
          %573 = vmatprep.subr.bf16.mxu0 0
          %574 = vmatpush1.bf16.msra.mxu0 0
          %575 = vmatprep.subr.bf16.mxu0 0
          %576 = vmatpush1.bf16.msra.mxu0 0
          %577 = vmatprep.subr.bf16.mxu0 0
          %578 = vmatpush1.bf16.msra.mxu0 0
          %579 = vmatprep.subr.bf16.mxu0 0
          %580 = vmatpush1.bf16.msra.mxu0 0
          %581 = vmatprep.subr.bf16.mxu0 0
          %582 = vmatpush1.bf16.msra.mxu0 0
          %583 = vmatprep.subr.bf16.mxu0 0
          %584 = vmatpush1.bf16.msra.mxu0 0
          %585 = vmatprep.subr.bf16.mxu0 0
          %586 = vmatpush1.bf16.msra.mxu0 0
          %587 = vmatprep.subr.bf16.mxu0 0
          %588 = vmatpush1.bf16.msra.mxu0 0
          %589 = vmatprep.subr.bf16.mxu0 0
          %590 = vmatpush1.bf16.msra.mxu0 0
          %591 = vmatprep.subr.bf16.mxu0 0
          %592 = vmatpush1.bf16.msra.mxu0 0
          %593 = vmatprep.subr.bf16.mxu0 0
          %594 = vmatpush1.bf16.msra.mxu0 0
          %595 = vmatprep.subr.bf16.mxu0 0
          %596 = vmatpush1.bf16.msra.mxu0 0
          %597 = vmatprep.mubr.bf16.mxu0 0
          %598 = vmatmul.mubr.bf16.gmra.mrb[0].mxu0 %v556
          %v599 = vpop.f32.mrb[0].mxu0
          %v600 = vadd.f32 0.0, %v599
          %v601 = vpop.f32.mrb[0].mxu0
          %v602 = vadd.f32 0.0, %v601
          %v603 = vpop.f32.mrb[0].mxu0
          %v604 = vpop.f32.mrb[0].mxu0
          %605 = vdwg.mxu0
          %v607 = vsel %vm554, %v525, 0
          %v610 = vsel %vm558, %v523, 0
          %v613 = vsel %vm558, %v524, 0
          %615 = vmatprep.subr.bf16.mxu0 %v522
          %616 = vmatpush1.bf16.msra.mxu0 %v521
          %617 = vmatprep.subr.bf16.mxu0 %v613
          %618 = vmatpush1.bf16.msra.mxu0 %v610
          %619 = vmatprep.subr.bf16.mxu0 0
          %620 = vmatpush1.bf16.msra.mxu0 0
          %621 = vmatprep.subr.bf16.mxu0 0
          %622 = vmatpush1.bf16.msra.mxu0 0
          %623 = vmatprep.subr.bf16.mxu0 0
          %624 = vmatpush1.bf16.msra.mxu0 0
          %625 = vmatprep.subr.bf16.mxu0 0
          %626 = vmatpush1.bf16.msra.mxu0 0
          %627 = vmatprep.subr.bf16.mxu0 0
          %628 = vmatpush1.bf16.msra.mxu0 0
          %629 = vmatprep.subr.bf16.mxu0 0
          %630 = vmatpush1.bf16.msra.mxu0 0
          %631 = vmatprep.subr.bf16.mxu0 0
          %632 = vmatpush1.bf16.msra.mxu0 0
          %633 = vmatprep.subr.bf16.mxu0 0
          %634 = vmatpush1.bf16.msra.mxu0 0
          %635 = vmatprep.subr.bf16.mxu0 0
          %636 = vmatpush1.bf16.msra.mxu0 0
          %637 = vmatprep.subr.bf16.mxu0 0
          %638 = vmatpush1.bf16.msra.mxu0 0
          %639 = vmatprep.subr.bf16.mxu0 0
          %640 = vmatpush1.bf16.msra.mxu0 0
          %641 = vmatprep.subr.bf16.mxu0 0
          %642 = vmatpush1.bf16.msra.mxu0 0
          %643 = vmatprep.subr.bf16.mxu0 0
          %644 = vmatpush1.bf16.msra.mxu0 0
          %645 = vmatprep.subr.bf16.mxu0 0
          %646 = vmatpush1.bf16.msra.mxu0 0
          %647 = vmatprep.mubr.bf16.mxu0 0
          %648 = vmatmul.mubr.bf16.gmra.mrb[0].mxu0 %v607
          %v649 = vpop.f32.mrb[0].mxu0
          %v650 = vadd.f32 %v600, %v649
          %v651 = vpop.f32.mrb[0].mxu0
          %v652 = vadd.f32 %v602, %v651
          %v653 = vpop.f32.mrb[0].mxu0
          %v654 = vpop.f32.mrb[0].mxu0
          %655 = vdwg.mxu0
          %657 = vrot.lane.b32.xlu0 %v458, 1
          %v658 = vpop.permute.xlu0 %657
          %661 = vrot.lane.b32.xlu0 %v457, 1
          %v662 = vpop.permute.xlu0 %661
          %v663 = vsel %vm466, %v662, %v658
          %v666 = vsel %vm466, %v658, %v662
          %667 = vrot.lane.b32.xlu0 %v457, 127
          %v668 = vpop.permute.xlu0 %667
          %669 = vrot.lane.b32.xlu0 %v458, 127
          %v670 = vpop.permute.xlu0 %669
          %v671 = vsel %vm475, %v668, %v670
          %v675 = vsel %vm475, %v670, %v668
          %v676 = vsel %vm497, %v671, %v666
          %v677 = vsel %vm498, %v675, %v663
          %v678 = vsel %vm517, %v666, %v671
          %v679 = vsel %vm518, %v663, %v675
          %v680 = vpack.c.bf16 %v457, %v676
          %v681 = vpack.c.bf16 %v458, %v677
          %v682 = vpack.c.bf16 %v678, %v678
          %v683 = vpack.c.bf16 %v679, %v679
          %s684 = scalar_lea.vmem %s2, 8
          %v685 = vld [vmem:[%s684] sm:$0xf]
          %v687 = vsel %vm554, %v685, 0
          %v690 = vsel %vm558, %v682, 0
          %v693 = vsel %vm558, %v683, 0
          %695 = vmatprep.subr.bf16.mxu0 %v681
          %696 = vmatpush1.bf16.msra.mxu0 %v680
          %697 = vmatprep.subr.bf16.mxu0 %v693
          %698 = vmatpush1.bf16.msra.mxu0 %v690
          %699 = vmatprep.subr.bf16.mxu0 0
          %700 = vmatpush1.bf16.msra.mxu0 0
          %701 = vmatprep.subr.bf16.mxu0 0
          %702 = vmatpush1.bf16.msra.mxu0 0
          %703 = vmatprep.subr.bf16.mxu0 0
          %704 = vmatpush1.bf16.msra.mxu0 0
          %705 = vmatprep.subr.bf16.mxu0 0
          %706 = vmatpush1.bf16.msra.mxu0 0
          %707 = vmatprep.subr.bf16.mxu0 0
          %708 = vmatpush1.bf16.msra.mxu0 0
          %709 = vmatprep.subr.bf16.mxu0 0
          %710 = vmatpush1.bf16.msra.mxu0 0
          %711 = vmatprep.subr.bf16.mxu0 0
          %712 = vmatpush1.bf16.msra.mxu0 0
          %713 = vmatprep.subr.bf16.mxu0 0
          %714 = vmatpush1.bf16.msra.mxu0 0
          %715 = vmatprep.subr.bf16.mxu0 0
          %716 = vmatpush1.bf16.msra.mxu0 0
          %717 = vmatprep.subr.bf16.mxu0 0
          %718 = vmatpush1.bf16.msra.mxu0 0
          %719 = vmatprep.subr.bf16.mxu0 0
          %720 = vmatpush1.bf16.msra.mxu0 0
          %721 = vmatprep.subr.bf16.mxu0 0
          %722 = vmatpush1.bf16.msra.mxu0 0
          %723 = vmatprep.subr.bf16.mxu0 0
          %724 = vmatpush1.bf16.msra.mxu0 0
          %725 = vmatprep.subr.bf16.mxu0 0
          %726 = vmatpush1.bf16.msra.mxu0 0
          %727 = vmatprep.mubr.bf16.mxu0 0
          %728 = vmatmul.mubr.bf16.gmra.mrb[0].mxu0 %v687
          %v729 = vpop.f32.mrb[0].mxu0
          %v730 = vadd.f32 0.0, %v729
          %v731 = vpop.f32.mrb[0].mxu0
          %v732 = vadd.f32 0.0, %v731
          %v733 = vpop.f32.mrb[0].mxu0
          %v734 = vpop.f32.mrb[0].mxu0
          %735 = vdwg.mxu0
          %v736 = vadd.f32 %v650, %v730
          %v737 = vadd.f32 %v652, %v732
          %v738 = vadd.f32 %v736, %v737
          %739 = vadd.xlane.f32.xlu0 %v738
          %v740 = vpop.xlane.xlu0 %739
          %v741 = vrcp.pop 256.0
          %v742 = vmul.f32 %v740, %v741
          %v743 = vsub.f32 %v736, %v742
          %v744 = vsub.f32 %v737, %v742
          %v745 = vmul.f32 %v743, %v743
          %v746 = vmul.f32 %v744, %v744
          %v747 = vadd.f32 %v745, %v746
          %748 = vadd.xlane.f32.xlu0 %v747
          %v749 = vpop.xlane.xlu0 %748
          %v750 = vmul.f32 %v749, %v741
          %v751 = vadd.f32 %v750, 1e-05
          %v752 = vrsqrt.pop %v751
          %v753 = vmul.f32 %v743, %v752
          %v754 = vmul.f32 %v744, %v752
          %v755 = vmax.f32 %v753, 0.0
          %v756 = vmax.f32 %v754, 0.0
          %757 = vst [vmem:[#allocation2] sm:$0xff] %v755
          %758 = vst [vmem:[#allocation2 + $0x8] sm:$0xff] %v756
          %v759 = vpack.c.bf16 %v755, %v755
          %v760 = vpack.c.bf16 %v756, %v756
          %v761 = vld [vmem:[%s5] sm:$0xf]
          %v762 = vld [vmem:[%s6] sm:$0xff]
          %764 = vset.pattern.permute.xlu0 0
          %765 = vperm.xlu0 %764, %v762
          %v766 = vpop.permute.xlu0 %765
          %vm768 = vcmask 64512
          %v770 = vsel %vm768, %v761, 0
          %v773 = vsel %vm558, %v759, 0
          %v776 = vsel %vm558, %v760, 0
          %778 = vmatprep.subr.bf16.mxu0 %v776
          %779 = vmatpush1.bf16.msra.mxu0 %v773
          %780 = vmatprep.subr.bf16.mxu0 0
          %781 = vmatpush1.bf16.msra.mxu0 0
          %782 = vmatprep.subr.bf16.mxu0 0
          %783 = vmatpush1.bf16.msra.mxu0 0
          %784 = vmatprep.subr.bf16.mxu0 0
          %785 = vmatpush1.bf16.msra.mxu0 0
          %786 = vmatprep.subr.bf16.mxu0 0
          %787 = vmatpush1.bf16.msra.mxu0 0
          %788 = vmatprep.subr.bf16.mxu0 0
          %789 = vmatpush1.bf16.msra.mxu0 0
          %790 = vmatprep.subr.bf16.mxu0 0
          %791 = vmatpush1.bf16.msra.mxu0 0
          %792 = vmatprep.subr.bf16.mxu0 0
          %793 = vmatpush1.bf16.msra.mxu0 0
          %794 = vmatprep.subr.bf16.mxu0 0
          %795 = vmatpush1.bf16.msra.mxu0 0
          %796 = vmatprep.subr.bf16.mxu0 0
          %797 = vmatpush1.bf16.msra.mxu0 0
          %798 = vmatprep.subr.bf16.mxu0 0
          %799 = vmatpush1.bf16.msra.mxu0 0
          %800 = vmatprep.subr.bf16.mxu0 0
          %801 = vmatpush1.bf16.msra.mxu0 0
          %802 = vmatprep.subr.bf16.mxu0 0
          %803 = vmatpush1.bf16.msra.mxu0 0
          %804 = vmatprep.subr.bf16.mxu0 0
          %805 = vmatpush1.bf16.msra.mxu0 0
          %806 = vmatprep.subr.bf16.mxu0 0
          %807 = vmatpush1.bf16.msra.mxu0 0
          %808 = vmatprep.subr.bf16.mxu0 0
          %809 = vmatpush1.bf16.msra.mxu0 0
          %810 = vmatprep.mubr.bf16.mxu0 0
          %811 = vmatmul.mubr.bf16.gmra.mrb[0].mxu0 %v770
          %v812 = vpop.f32.mrb[0].mxu0
          %v813 = vadd.f32 %v766, %v812
          %v814 = vpop.f32.mrb[0].mxu0
          %v815 = vadd.f32 %v766, %v814
          %v816 = vpop.f32.mrb[0].mxu0
          %v817 = vpop.f32.mrb[0].mxu0
          %818 = vdwg.mxu0
          %v819 = vpack.c.bf16 %v813, %v813
          %v820 = vpack.c.bf16 %v815, %v815
          %v823 = vunpack.c.l.b16 %v819
          %v824 = vunpack.c.l.b16 %v820
          %v825 = vpack.c.b16 %v824, %v823
          %827 = vst [vmem:[#allocation3] sm:$0xff] %v825
          %v828 = vld [vmem:[%s7] sm:$0xf]
          %v829 = vld [vmem:[%s8] sm:$0xff]
          %831 = vset.pattern.permute.xlu0 0
          %832 = vperm.xlu0 %831, %v829
          %v833 = vpop.permute.xlu0 %832
          %v836 = vsel %vm768, %v828, 0
          %838 = vmatprep.subr.bf16.mxu0 %v776
          %839 = vmatpush1.bf16.msra.mxu0 %v773
          %840 = vmatprep.subr.bf16.mxu0 0
          %841 = vmatpush1.bf16.msra.mxu0 0
          %842 = vmatprep.subr.bf16.mxu0 0
          %843 = vmatpush1.bf16.msra.mxu0 0
          %844 = vmatprep.subr.bf16.mxu0 0
          %845 = vmatpush1.bf16.msra.mxu0 0
          %846 = vmatprep.subr.bf16.mxu0 0
          %847 = vmatpush1.bf16.msra.mxu0 0
          %848 = vmatprep.subr.bf16.mxu0 0
          %849 = vmatpush1.bf16.msra.mxu0 0
          %850 = vmatprep.subr.bf16.mxu0 0
          %851 = vmatpush1.bf16.msra.mxu0 0
          %852 = vmatprep.subr.bf16.mxu0 0
          %853 = vmatpush1.bf16.msra.mxu0 0
          %854 = vmatprep.subr.bf16.mxu0 0
          %855 = vmatpush1.bf16.msra.mxu0 0
          %856 = vmatprep.subr.bf16.mxu0 0
          %857 = vmatpush1.bf16.msra.mxu0 0
          %858 = vmatprep.subr.bf16.mxu0 0
          %859 = vmatpush1.bf16.msra.mxu0 0
          %860 = vmatprep.subr.bf16.mxu0 0
          %861 = vmatpush1.bf16.msra.mxu0 0
          %862 = vmatprep.subr.bf16.mxu0 0
          %863 = vmatpush1.bf16.msra.mxu0 0
          %864 = vmatprep.subr.bf16.mxu0 0
          %865 = vmatpush1.bf16.msra.mxu0 0
          %866 = vmatprep.subr.bf16.mxu0 0
          %867 = vmatpush1.bf16.msra.mxu0 0
          %868 = vmatprep.subr.bf16.mxu0 0
          %869 = vmatpush1.bf16.msra.mxu0 0
          %870 = vmatprep.mubr.bf16.mxu0 0
          %871 = vmatmul.mubr.bf16.gmra.mrb[0].mxu0 %v836
          %v872 = vpop.f32.mrb[0].mxu0
          %v873 = vadd.f32 %v833, %v872
          %v874 = vpop.f32.mrb[0].mxu0
          %v875 = vadd.f32 %v833, %v874
          %v876 = vpop.f32.mrb[0].mxu0
          %v877 = vpop.f32.mrb[0].mxu0
          %878 = vdwg.mxu0
          %v879 = vpack.c.bf16 %v873, %v873
          %v880 = vpack.c.bf16 %v875, %v875
          %v883 = vunpack.c.l.b16 %v879
          %v884 = vunpack.c.l.b16 %v880
          %v885 = vpack.c.b16 %v884, %v883
          %887 = vst [vmem:[#allocation4] sm:$0xff] %v885
        $region68: #{tpu_custom_call.1} parent=59 // pred_fallthru
          _
        %s888 = smul.u32 %s31, 128
        %s889 = sshra.s32 %s888, 7
        %s890 = sand.u32 %s888, 127
        %s891 = smul.addr %s889, 8
        %s892 = scalar_lea.vmem [#allocation2], %s891
        %v893 = vld [vmem:[%s892] sm:$0xff]
        %v894 = vld [vmem:[%s3] sm:$0xf]
        %v895 = vpack.c.bf16 %v893, %v893
        %v896 = vld [vmem:[%s4] sm:$0xff]
        %898 = vset.pattern.permute.xlu0 0
        %899 = vperm.xlu0 %898, %v896
        %v900 = vpop.permute.xlu0 %899
        %vm902 = vcmask 64512
        %v904 = vsel %vm902, %v894, 0
        %vm906 = vcmask 1043456
        %v908 = vsel %vm906, %v895, 0
        %910 = vmatprep.subr.bf16.mxu0 0
        %911 = vmatpush1.bf16.msra.mxu0 %v908
        %912 = vmatprep.subr.bf16.mxu0 0
        %913 = vmatpush1.bf16.msra.mxu0 0
        %914 = vmatprep.subr.bf16.mxu0 0
        %915 = vmatpush1.bf16.msra.mxu0 0
        %916 = vmatprep.subr.bf16.mxu0 0
        %917 = vmatpush1.bf16.msra.mxu0 0
        %918 = vmatprep.subr.bf16.mxu0 0
        %919 = vmatpush1.bf16.msra.mxu0 0
        %920 = vmatprep.subr.bf16.mxu0 0
        %921 = vmatpush1.bf16.msra.mxu0 0
        %922 = vmatprep.subr.bf16.mxu0 0
        %923 = vmatpush1.bf16.msra.mxu0 0
        %924 = vmatprep.subr.bf16.mxu0 0
        %925 = vmatpush1.bf16.msra.mxu0 0
        %926 = vmatprep.subr.bf16.mxu0 0
        %927 = vmatpush1.bf16.msra.mxu0 0
        %928 = vmatprep.subr.bf16.mxu0 0
        %929 = vmatpush1.bf16.msra.mxu0 0
        %930 = vmatprep.subr.bf16.mxu0 0
        %931 = vmatpush1.bf16.msra.mxu0 0
        %932 = vmatprep.subr.bf16.mxu0 0
        %933 = vmatpush1.bf16.msra.mxu0 0
        %934 = vmatprep.subr.bf16.mxu0 0
        %935 = vmatpush1.bf16.msra.mxu0 0
        %936 = vmatprep.subr.bf16.mxu0 0
        %937 = vmatpush1.bf16.msra.mxu0 0
        %938 = vmatprep.subr.bf16.mxu0 0
        %939 = vmatpush1.bf16.msra.mxu0 0
        %940 = vmatprep.subr.bf16.mxu0 0
        %941 = vmatpush1.bf16.msra.mxu0 0
        %942 = vmatprep.mubr.bf16.mxu0 0
        %943 = vmatmul.mubr.bf16.gmra.mrb[0].mxu0 %v904
        %v944 = vpop.f32.mrb[0].mxu0
        %v945 = vadd.f32 %v900, %v944
        %v946 = vpop.f32.mrb[0].mxu0
        %v947 = vpop.f32.mrb[0].mxu0
        %v948 = vpop.f32.mrb[0].mxu0
        %949 = vdwg.mxu0
        %v950 = vpack.c.bf16 %v945, %v945
        %v951 = vld [vmem:[#allocation3] sm:$0xff]
        %v953 = vunpack.c.l.b16 %v951
        %v954 = vunpack.c.h.b16 %v951
        %v955 = vpack.c.b16 %v953, %v953
        %v956 = vpack.c.b16 %v954, %v954
        %959 = vxpose.xlu0.c.b16.start [1/8] %v955, 128
        %960 = vxpose.xlu0.c.b16.cont [2/8] 0, 128
        %961 = vxpose.xlu0.c.b16.cont [3/8] 0, 128
        %962 = vxpose.xlu0.c.b16.cont [4/8] 0, 128
        %963 = vxpose.xlu0.c.b16.cont [5/8] 0, 128
        %964 = vxpose.xlu0.c.b16.cont [6/8] 0, 128
        %965 = vxpose.xlu0.c.b16.cont [7/8] 0, 128
        %966 = vxpose.xlu0.c.b16.end [8/8] 0, 128
        %v967 = vpop.trf.xlu0
        %v968 = vpop.trf.xlu0
        %v969 = vpop.trf.xlu0
        %v970 = vpop.trf.xlu0
        %v971 = vpop.trf.xlu0
        %v972 = vpop.trf.xlu0
        %v973 = vpop.trf.xlu0
        %v974 = vpop.trf.xlu0
        %975 = vxpose.xlu0.c.b16.start [1/8] %v956, 128
        %976 = vxpose.xlu0.c.b16.cont [2/8] 0, 128
        %977 = vxpose.xlu0.c.b16.cont [3/8] 0, 128
        %978 = vxpose.xlu0.c.b16.cont [4/8] 0, 128
        %979 = vxpose.xlu0.c.b16.cont [5/8] 0, 128
        %980 = vxpose.xlu0.c.b16.cont [6/8] 0, 128
        %981 = vxpose.xlu0.c.b16.cont [7/8] 0, 128
        %982 = vxpose.xlu0.c.b16.end [8/8] 0, 128
        %v983 = vpop.trf.xlu0
        %v984 = vpop.trf.xlu0
        %v985 = vpop.trf.xlu0
        %v986 = vpop.trf.xlu0
        %v987 = vpop.trf.xlu0
        %v988 = vpop.trf.xlu0
        %v989 = vpop.trf.xlu0
        %v990 = vpop.trf.xlu0
        %v992 = vsel %vm902, %v967, 0
        %v995 = vsel %vm902, %v968, 0
        %v998 = vsel %vm902, %v969, 0
        %v1001 = vsel %vm902, %v970, 0
        %v1004 = vsel %vm902, %v971, 0
        %v1007 = vsel %vm902, %v972, 0
        %v1010 = vsel %vm902, %v973, 0
        %v1013 = vsel %vm902, %v974, 0
        %v1016 = vsel %vm902, %v983, 0
        %v1019 = vsel %vm902, %v984, 0
        %v1022 = vsel %vm902, %v985, 0
        %v1025 = vsel %vm902, %v986, 0
        %v1028 = vsel %vm902, %v987, 0
        %v1031 = vsel %vm902, %v988, 0
        %v1034 = vsel %vm902, %v989, 0
        %v1037 = vsel %vm902, %v990, 0
        %v1040 = vsel %vm906, %v950, 0
        %1042 = vmatprep.subr.bf16.mxu0 0
        %1043 = vmatpush1.bf16.msra.mxu0 %v1040
        %1044 = vmatprep.subr.bf16.mxu0 0
        %1045 = vmatpush1.bf16.msra.mxu0 0
        %1046 = vmatprep.subr.bf16.mxu0 0
        %1047 = vmatpush1.bf16.msra.mxu0 0
        %1048 = vmatprep.subr.bf16.mxu0 0
        %1049 = vmatpush1.bf16.msra.mxu0 0
        %1050 = vmatprep.subr.bf16.mxu0 0
        %1051 = vmatpush1.bf16.msra.mxu0 0
        %1052 = vmatprep.subr.bf16.mxu0 0
        %1053 = vmatpush1.bf16.msra.mxu0 0
        %1054 = vmatprep.subr.bf16.mxu0 0
        %1055 = vmatpush1.bf16.msra.mxu0 0
        %1056 = vmatprep.subr.bf16.mxu0 0
        %1057 = vmatpush1.bf16.msra.mxu0 0
        %1058 = vmatprep.subr.bf16.mxu0 0
        %1059 = vmatpush1.bf16.msra.mxu0 0
        %1060 = vmatprep.subr.bf16.mxu0 0
        %1061 = vmatpush1.bf16.msra.mxu0 0
        %1062 = vmatprep.subr.bf16.mxu0 0
        %1063 = vmatpush1.bf16.msra.mxu0 0
        %1064 = vmatprep.subr.bf16.mxu0 0
        %1065 = vmatpush1.bf16.msra.mxu0 0
        %1066 = vmatprep.subr.bf16.mxu0 0
        %1067 = vmatpush1.bf16.msra.mxu0 0
        %1068 = vmatprep.subr.bf16.mxu0 0
        %1069 = vmatpush1.bf16.msra.mxu0 0
        %1070 = vmatprep.subr.bf16.mxu0 0
        %1071 = vmatpush1.bf16.msra.mxu0 0
        %1072 = vmatprep.subr.bf16.mxu0 0
        %1073 = vmatpush1.bf16.msra.mxu0 0
        %1074 = vmatprep.mubr.bf16.mxu0 0
        %1075 = vmatmul.mubr.bf16.gmra.mrb[0].mxu0 %v992
        %v1076 = vpop.f32.mrb[0].mxu0
        %v1077 = vadd.f32 0.0, %v1076
        %v1078 = vpop.f32.mrb[0].mxu0
        %v1079 = vpop.f32.mrb[0].mxu0
        %v1080 = vadd.f32 0.0, %v1079
        %v1081 = vpop.f32.mrb[0].mxu0
        %1082 = vmatprep.mubr.bf16.mxu0 0
        %1083 = vmatmul.mubr.bf16.gmra.mrb[0].mxu0 %v995
        %v1084 = vpop.f32.mrb[0].mxu0
        %v1085 = vadd.f32 0.0, %v1084
        %v1086 = vpop.f32.mrb[0].mxu0
        %v1087 = vpop.f32.mrb[0].mxu0
        %v1088 = vadd.f32 0.0, %v1087
        %v1089 = vpop.f32.mrb[0].mxu0
        %1090 = vmatprep.mubr.bf16.mxu0 0
        %1091 = vmatmul.mubr.bf16.gmra.mrb[0].mxu0 %v998
        %v1092 = vpop.f32.mrb[0].mxu0
        %v1093 = vadd.f32 0.0, %v1092
        %v1094 = vpop.f32.mrb[0].mxu0
        %v1095 = vpop.f32.mrb[0].mxu0
        %v1096 = vadd.f32 0.0, %v1095
        %v1097 = vpop.f32.mrb[0].mxu0
        %1098 = vmatprep.mubr.bf16.mxu0 0
        %1099 = vmatmul.mubr.bf16.gmra.mrb[0].mxu0 %v1001
        %v1100 = vpop.f32.mrb[0].mxu0
        %v1101 = vadd.f32 0.0, %v1100
        %v1102 = vpop.f32.mrb[0].mxu0
        %v1103 = vpop.f32.mrb[0].mxu0
        %v1104 = vadd.f32 0.0, %v1103
        %v1105 = vpop.f32.mrb[0].mxu0
        %1106 = vmatprep.mubr.bf16.mxu0 0
        %1107 = vmatmul.mubr.bf16.gmra.mrb[0].mxu0 %v1004
        %v1108 = vpop.f32.mrb[0].mxu0
        %v1109 = vadd.f32 0.0, %v1108
        %v1110 = vpop.f32.mrb[0].mxu0
        %v1111 = vpop.f32.mrb[0].mxu0
        %v1112 = vadd.f32 0.0, %v1111
        %v1113 = vpop.f32.mrb[0].mxu0
        %1114 = vmatprep.mubr.bf16.mxu0 0
        %1115 = vmatmul.mubr.bf16.gmra.mrb[0].mxu0 %v1007
        %v1116 = vpop.f32.mrb[0].mxu0
        %v1117 = vadd.f32 0.0, %v1116
        %v1118 = vpop.f32.mrb[0].mxu0
        %v1119 = vpop.f32.mrb[0].mxu0
        %v1120 = vadd.f32 0.0, %v1119
        %v1121 = vpop.f32.mrb[0].mxu0
        %1122 = vmatprep.mubr.bf16.mxu0 0
        %1123 = vmatmul.mubr.bf16.gmra.mrb[0].mxu0 %v1010
        %v1124 = vpop.f32.mrb[0].mxu0
        %v1125 = vadd.f32 0.0, %v1124
        %v1126 = vpop.f32.mrb[0].mxu0
        %v1127 = vpop.f32.mrb[0].mxu0
        %v1128 = vadd.f32 0.0, %v1127
        %v1129 = vpop.f32.mrb[0].mxu0
        %1130 = vmatprep.mubr.bf16.mxu0 0
        %1131 = vmatmul.mubr.bf16.gmra.mrb[0].mxu0 %v1013
        %v1132 = vpop.f32.mrb[0].mxu0
        %v1133 = vadd.f32 0.0, %v1132
        %v1134 = vpop.f32.mrb[0].mxu0
        %v1135 = vpop.f32.mrb[0].mxu0
        %v1136 = vadd.f32 0.0, %v1135
        %v1137 = vpop.f32.mrb[0].mxu0
        %1138 = vmatprep.mubr.bf16.mxu0 0
        %1139 = vmatmul.mubr.bf16.gmra.mrb[0].mxu0 %v1016
        %v1140 = vpop.f32.mrb[0].mxu0
        %v1141 = vadd.f32 0.0, %v1140
        %v1142 = vpop.f32.mrb[0].mxu0
        %v1143 = vpop.f32.mrb[0].mxu0
        %v1144 = vadd.f32 0.0, %v1143
        %v1145 = vpop.f32.mrb[0].mxu0
        %1146 = vmatprep.mubr.bf16.mxu0 0
        %1147 = vmatmul.mubr.bf16.gmra.mrb[0].mxu0 %v1019
        %v1148 = vpop.f32.mrb[0].mxu0
        %v1149 = vadd.f32 0.0, %v1148
        %v1150 = vpop.f32.mrb[0].mxu0
        %v1151 = vpop.f32.mrb[0].mxu0
        %v1152 = vadd.f32 0.0, %v1151
        %v1153 = vpop.f32.mrb[0].mxu0
        %1154 = vmatprep.mubr.bf16.mxu0 0
        %1155 = vmatmul.mubr.bf16.gmra.mrb[0].mxu0 %v1022
        %v1156 = vpop.f32.mrb[0].mxu0
        %v1157 = vadd.f32 0.0, %v1156
        %v1158 = vpop.f32.mrb[0].mxu0
        %v1159 = vpop.f32.mrb[0].mxu0
        %v1160 = vadd.f32 0.0, %v1159
        %v1161 = vpop.f32.mrb[0].mxu0
        %1162 = vmatprep.mubr.bf16.mxu0 0
        %1163 = vmatmul.mubr.bf16.gmra.mrb[0].mxu0 %v1025
        %v1164 = vpop.f32.mrb[0].mxu0
        %v1165 = vadd.f32 0.0, %v1164
        %v1166 = vpop.f32.mrb[0].mxu0
        %v1167 = vpop.f32.mrb[0].mxu0
        %v1168 = vadd.f32 0.0, %v1167
        %v1169 = vpop.f32.mrb[0].mxu0
        %1170 = vmatprep.mubr.bf16.mxu0 0
        %1171 = vmatmul.mubr.bf16.gmra.mrb[0].mxu0 %v1028
        %v1172 = vpop.f32.mrb[0].mxu0
        %v1173 = vadd.f32 0.0, %v1172
        %v1174 = vpop.f32.mrb[0].mxu0
        %v1175 = vpop.f32.mrb[0].mxu0
        %v1176 = vadd.f32 0.0, %v1175
        %v1177 = vpop.f32.mrb[0].mxu0
        %1178 = vmatprep.mubr.bf16.mxu0 0
        %1179 = vmatmul.mubr.bf16.gmra.mrb[0].mxu0 %v1031
        %v1180 = vpop.f32.mrb[0].mxu0
        %v1181 = vadd.f32 0.0, %v1180
        %v1182 = vpop.f32.mrb[0].mxu0
        %v1183 = vpop.f32.mrb[0].mxu0
        %v1184 = vadd.f32 0.0, %v1183
        %v1185 = vpop.f32.mrb[0].mxu0
        %1186 = vmatprep.mubr.bf16.mxu0 0
        %1187 = vmatmul.mubr.bf16.gmra.mrb[0].mxu0 %v1034
        %v1188 = vpop.f32.mrb[0].mxu0
        %v1189 = vadd.f32 0.0, %v1188
        %v1190 = vpop.f32.mrb[0].mxu0
        %v1191 = vpop.f32.mrb[0].mxu0
        %v1192 = vadd.f32 0.0, %v1191
        %v1193 = vpop.f32.mrb[0].mxu0
        %1194 = vmatprep.mubr.bf16.mxu0 0
        %1195 = vmatmul.mubr.bf16.gmra.mrb[0].mxu0 %v1037
        %v1196 = vpop.f32.mrb[0].mxu0
        %v1197 = vadd.f32 0.0, %v1196
        %v1198 = vpop.f32.mrb[0].mxu0
        %v1199 = vpop.f32.mrb[0].mxu0
        %v1200 = vadd.f32 0.0, %v1199
        %v1201 = vpop.f32.mrb[0].mxu0
        %1202 = vdwg.mxu0
        %v1203 = vmax.f32 %v1077, %v1093
        %v1204 = vmax.f32 %v1080, %v1096
        %v1205 = vmax.f32 %v1085, %v1101
        %v1206 = vmax.f32 %v1088, %v1104
        %v1207 = vmax.f32 %v1203, %v1109
        %v1208 = vmax.f32 %v1204, %v1112
        %v1209 = vmax.f32 %v1205, %v1117
        %v1210 = vmax.f32 %v1206, %v1120
        %v1211 = vmax.f32 %v1207, %v1125
        %v1212 = vmax.f32 %v1208, %v1128
        %v1213 = vmax.f32 %v1209, %v1133
        %v1214 = vmax.f32 %v1210, %v1136
        %v1215 = vmax.f32 %v1211, %v1141
        %v1216 = vmax.f32 %v1212, %v1144
        %v1217 = vmax.f32 %v1213, %v1149
        %v1218 = vmax.f32 %v1214, %v1152
        %v1219 = vmax.f32 %v1215, %v1157
        %v1220 = vmax.f32 %v1216, %v1160
        %v1221 = vmax.f32 %v1217, %v1165
        %v1222 = vmax.f32 %v1218, %v1168
        %v1223 = vmax.f32 %v1219, %v1173
        %v1224 = vmax.f32 %v1220, %v1176
        %v1225 = vmax.f32 %v1221, %v1181
        %v1226 = vmax.f32 %v1222, %v1184
        %v1227 = vmax.f32 %v1223, %v1189
        %v1228 = vmax.f32 %v1224, %v1192
        %v1229 = vmax.f32 %v1225, %v1197
        %v1230 = vmax.f32 %v1226, %v1200
        %v1231 = vmax.f32 %v1227, %v1228
        %v1232 = vmax.f32 %v1229, %v1230
        %v1233 = vmax.f32 %v1231, %v1232
        %v1234 = vrot.slane %v1233, 4
        %v1235 = vmax.f32 %v1233, %v1234
        %v1236 = vrot.slane %v1235, 2
        %v1237 = vmax.f32 %v1235, %v1236
        %v1238 = vrot.slane %v1237, 1
        %v1239 = vmax.f32 %v1237, %v1238
        %v1240 = vsub.f32 %v1077, %v1239
        %v1241 = vsub.f32 %v1080, %v1239
        %v1242 = vsub.f32 %v1085, %v1239
        %v1243 = vsub.f32 %v1088, %v1239
        %v1244 = vsub.f32 %v1093, %v1239
        %v1245 = vsub.f32 %v1096, %v1239
        %v1246 = vsub.f32 %v1101, %v1239
        %v1247 = vsub.f32 %v1104, %v1239
        %v1248 = vsub.f32 %v1109, %v1239
        %v1249 = vsub.f32 %v1112, %v1239
        %v1250 = vsub.f32 %v1117, %v1239
        %v1251 = vsub.f32 %v1120, %v1239
        %v1252 = vsub.f32 %v1125, %v1239
        %v1253 = vsub.f32 %v1128, %v1239
        %v1254 = vsub.f32 %v1133, %v1239
        %v1255 = vsub.f32 %v1136, %v1239
        %v1256 = vsub.f32 %v1141, %v1239
        %v1257 = vsub.f32 %v1144, %v1239
        %v1258 = vsub.f32 %v1149, %v1239
        %v1259 = vsub.f32 %v1152, %v1239
        %v1260 = vsub.f32 %v1157, %v1239
        %v1261 = vsub.f32 %v1160, %v1239
        %v1262 = vsub.f32 %v1165, %v1239
        %v1263 = vsub.f32 %v1168, %v1239
        %v1264 = vsub.f32 %v1173, %v1239
        %v1265 = vsub.f32 %v1176, %v1239
        %v1266 = vsub.f32 %v1181, %v1239
        %v1267 = vsub.f32 %v1184, %v1239
        %v1268 = vsub.f32 %v1189, %v1239
        %v1269 = vsub.f32 %v1192, %v1239
        %v1270 = vsub.f32 %v1197, %v1239
        %v1271 = vsub.f32 %v1200, %v1239
        %v1272 = vmul.f32 %v1240, 1.442695
        %v1273 = vpow.pop %v1272
        %v1274 = vmul.f32 %v1241, 1.442695
        %v1275 = vpow.pop %v1274
        %v1276 = vmul.f32 %v1242, 1.442695
        %v1277 = vpow.pop %v1276
        %v1278 = vmul.f32 %v1243, 1.442695
        %v1279 = vpow.pop %v1278
        %v1280 = vmul.f32 %v1244, 1.442695
        %v1281 = vpow.pop %v1280
        %v1282 = vmul.f32 %v1245, 1.442695
        %v1283 = vpow.pop %v1282
        %v1284 = vmul.f32 %v1246, 1.442695
        %v1285 = vpow.pop %v1284
        %v1286 = vmul.f32 %v1247, 1.442695
        %v1287 = vpow.pop %v1286
        %v1288 = vmul.f32 %v1248, 1.442695
        %v1289 = vpow.pop %v1288
        %v1290 = vmul.f32 %v1249, 1.442695
        %v1291 = vpow.pop %v1290
        %v1292 = vmul.f32 %v1250, 1.442695
        %v1293 = vpow.pop %v1292
        %v1294 = vmul.f32 %v1251, 1.442695
        %v1295 = vpow.pop %v1294
        %v1296 = vmul.f32 %v1252, 1.442695
        %v1297 = vpow.pop %v1296
        %v1298 = vmul.f32 %v1253, 1.442695
        %v1299 = vpow.pop %v1298
        %v1300 = vmul.f32 %v1254, 1.442695
        %v1301 = vpow.pop %v1300
        %v1302 = vmul.f32 %v1255, 1.442695
        %v1303 = vpow.pop %v1302
        %v1304 = vmul.f32 %v1256, 1.442695
        %v1305 = vpow.pop %v1304
        %v1306 = vmul.f32 %v1257, 1.442695
        %v1307 = vpow.pop %v1306
        %v1308 = vmul.f32 %v1258, 1.442695
        %v1309 = vpow.pop %v1308
        %v1310 = vmul.f32 %v1259, 1.442695
        %v1311 = vpow.pop %v1310
        %v1312 = vmul.f32 %v1260, 1.442695
        %v1313 = vpow.pop %v1312
        %v1314 = vmul.f32 %v1261, 1.442695
        %v1315 = vpow.pop %v1314
        %v1316 = vmul.f32 %v1262, 1.442695
        %v1317 = vpow.pop %v1316
        %v1318 = vmul.f32 %v1263, 1.442695
        %v1319 = vpow.pop %v1318
        %v1320 = vmul.f32 %v1264, 1.442695
        %v1321 = vpow.pop %v1320
        %v1322 = vmul.f32 %v1265, 1.442695
        %v1323 = vpow.pop %v1322
        %v1324 = vmul.f32 %v1266, 1.442695
        %v1325 = vpow.pop %v1324
        %v1326 = vmul.f32 %v1267, 1.442695
        %v1327 = vpow.pop %v1326
        %v1328 = vmul.f32 %v1268, 1.442695
        %v1329 = vpow.pop %v1328
        %v1330 = vmul.f32 %v1269, 1.442695
        %v1331 = vpow.pop %v1330
        %v1332 = vmul.f32 %v1270, 1.442695
        %v1333 = vpow.pop %v1332
        %v1334 = vmul.f32 %v1271, 1.442695
        %v1335 = vpow.pop %v1334
        %v1336 = vadd.f32 %v1273, %v1275
        %v1337 = vadd.f32 %v1336, %v1277
        %v1338 = vadd.f32 %v1337, %v1279
        %v1339 = vadd.f32 %v1338, %v1281
        %v1340 = vadd.f32 %v1339, %v1283
        %v1341 = vadd.f32 %v1340, %v1285
        %v1342 = vadd.f32 %v1341, %v1287
        %v1343 = vadd.f32 %v1342, %v1289
        %v1344 = vadd.f32 %v1343, %v1291
        %v1345 = vadd.f32 %v1344, %v1293
        %v1346 = vadd.f32 %v1345, %v1295
        %v1347 = vadd.f32 %v1346, %v1297
        %v1348 = vadd.f32 %v1347, %v1299
        %v1349 = vadd.f32 %v1348, %v1301
        %v1350 = vadd.f32 %v1349, %v1303
        %v1351 = vadd.f32 %v1350, %v1305
        %v1352 = vadd.f32 %v1351, %v1307
        %v1353 = vadd.f32 %v1352, %v1309
        %v1354 = vadd.f32 %v1353, %v1311
        %v1355 = vadd.f32 %v1354, %v1313
        %v1356 = vadd.f32 %v1355, %v1315
        %v1357 = vadd.f32 %v1356, %v1317
        %v1358 = vadd.f32 %v1357, %v1319
        %v1359 = vadd.f32 %v1358, %v1321
        %v1360 = vadd.f32 %v1359, %v1323
        %v1361 = vadd.f32 %v1360, %v1325
        %v1362 = vadd.f32 %v1361, %v1327
        %v1363 = vadd.f32 %v1362, %v1329
        %v1364 = vadd.f32 %v1363, %v1331
        %v1365 = vadd.f32 %v1364, %v1333
        %v1366 = vadd.f32 %v1365, %v1335
        %v1367 = vrot.slane %v1366, 4
        %v1368 = vadd.f32 %v1366, %v1367
        %v1369 = vrot.slane %v1368, 2
        %v1370 = vadd.f32 %v1368, %v1369
        %v1371 = vrot.slane %v1370, 1
        %v1372 = vadd.f32 %v1370, %v1371
        %v1373 = vld [vmem:[#allocation4] sm:$0xff]
        %v1374 = vpack.c.bf16 %v1275, %v1273
        %v1375 = vpack.c.bf16 %v1279, %v1277
        %v1376 = vpack.c.bf16 %v1283, %v1281
        %v1377 = vpack.c.bf16 %v1287, %v1285
        %v1378 = vpack.c.bf16 %v1291, %v1289
        %v1379 = vpack.c.bf16 %v1295, %v1293
        %v1380 = vpack.c.bf16 %v1299, %v1297
        %v1381 = vpack.c.bf16 %v1303, %v1301
        %v1382 = vpack.c.bf16 %v1307, %v1305
        %v1383 = vpack.c.bf16 %v1311, %v1309
        %v1384 = vpack.c.bf16 %v1315, %v1313
        %v1385 = vpack.c.bf16 %v1319, %v1317
        %v1386 = vpack.c.bf16 %v1323, %v1321
        %v1387 = vpack.c.bf16 %v1327, %v1325
        %v1388 = vpack.c.bf16 %v1331, %v1329
        %v1389 = vpack.c.bf16 %v1335, %v1333
        %v1391 = vunpack.c.l.b16 %v1373
        %v1392 = vunpack.c.h.b16 %v1373
        %v1393 = vpack.c.b16 %v1391, %v1391
        %v1394 = vpack.c.b16 %v1392, %v1392
        %1397 = vmatprep.subr.bf16.mxu0 0
        %1398 = vmatpush1.bf16.msra.mxu0 %v1374
        %1399 = vmatprep.subr.bf16.mxu0 0
        %1400 = vmatpush1.bf16.msra.mxu0 %v1375
        %1401 = vmatprep.subr.bf16.mxu0 0
        %1402 = vmatpush1.bf16.msra.mxu0 %v1376
        %1403 = vmatprep.subr.bf16.mxu0 0
        %1404 = vmatpush1.bf16.msra.mxu0 %v1377
        %1405 = vmatprep.subr.bf16.mxu0 0
        %1406 = vmatpush1.bf16.msra.mxu0 %v1378
        %1407 = vmatprep.subr.bf16.mxu0 0
        %1408 = vmatpush1.bf16.msra.mxu0 %v1379
        %1409 = vmatprep.subr.bf16.mxu0 0
        %1410 = vmatpush1.bf16.msra.mxu0 %v1380
        %1411 = vmatprep.subr.bf16.mxu0 0
        %1412 = vmatpush1.bf16.msra.mxu0 %v1381
        %1413 = vmatprep.subr.bf16.mxu0 0
        %1414 = vmatpush1.bf16.msra.mxu0 %v1382
        %1415 = vmatprep.subr.bf16.mxu0 0
        %1416 = vmatpush1.bf16.msra.mxu0 %v1383
        %1417 = vmatprep.subr.bf16.mxu0 0
        %1418 = vmatpush1.bf16.msra.mxu0 %v1384
        %1419 = vmatprep.subr.bf16.mxu0 0
        %1420 = vmatpush1.bf16.msra.mxu0 %v1385
        %1421 = vmatprep.subr.bf16.mxu0 0
        %1422 = vmatpush1.bf16.msra.mxu0 %v1386
        %1423 = vmatprep.subr.bf16.mxu0 0
        %1424 = vmatpush1.bf16.msra.mxu0 %v1387
        %1425 = vmatprep.subr.bf16.mxu0 0
        %1426 = vmatpush1.bf16.msra.mxu0 %v1388
        %1427 = vmatprep.subr.bf16.mxu0 0
        %1428 = vmatpush1.bf16.msra.mxu0 %v1389
        %1429 = vmatprep.mubr.bf16.mxu0 %v1394
        %1430 = vmatmul.mubr.bf16.gmra.mrb[0].mxu0 %v1393
        %v1431 = vpop.f32.mrb[0].mxu0
        %v1432 = vadd.f32 0.0, %v1431
        %v1433 = vpop.f32.mrb[0].mxu0
        %v1434 = vpop.f32.mrb[0].mxu0
        %v1435 = vpop.f32.mrb[0].mxu0
        %1436 = vdwg.mxu0
        %v1437 = vrcp.pop %v1372
        %s1438 = sld [smem:[#allocation5]]
        %v1439 = vmul.f32 %v1432, %v1437
        %v1440 = vstv %s1438
        %v1441 = vmul.f32 %v1440, %v1439
        %v1442 = vadd.f32 %v1441, %v893
        %1443 = vst [vmem:[%s380] sm:$0xff] %v1442
        %s1444 = sand.u32 %s263, 1
        %s1445 = scalar_lea.sflag [#allocation8], %s1444
        %s1446 = sand.u32 %s263, 1
        %s1447 = smul.addr %s1446, 8
        %s1448 = scalar_lea.vmem [#allocation9], %s1447
        // Predicated region
        $region69: #{tpu_custom_call.1} parent=59 // pred_check
          %p1449 = pneg %p273
        $region70: #{tpu_custom_call.1} parent=59 // pred_check_branch
          %1451 = sbr.rel (%p1449) target = $region72
        $region71: #{tpu_custom_call.1} parent=59 // pred_region
          %s1453 = ssub.s32 128, 128
          %1454 = vsyncadd %s1445, %s1453
          %s1455 = smul.addr %s30, 2
          %s1456 = sadd.s32 %s31, %s1455
          %s1457 = smul.addr %s1456, 128
          %s1458 = scalar_lea.hbm %s10, %s1457
          %s1460 = sshll.u32 %s1448, 4
          %s1461 = int_to_ptr.vmem [resolvable:$true] %s1460
          %1463 = dma.vmem_to_hbm [thread:$0]  %s1461, 128, %s1458, %s1445
        $region72: #{tpu_custom_call.1} parent=59 // pred_fallthru
          _
      $region60: #{tpu_custom_call.1} parent=5 // pred_fallthru
        _
      %p1464 = scmp.le.s32.totalorder 2, %s21
      // Predicated region
      $region73: #{tpu_custom_call.1} parent=5 // pred_check
        %p1465 = pneg %p1464
      $region74: #{tpu_custom_call.1} parent=5 // pred_check_branch
        %1467 = sbr.rel (%p1465) target = $region76
      $region75: #{tpu_custom_call.1} parent=5 // pred_region
        %s1468 = ssub.s32 %s21, 2
        // Predicated region
        $region77: #{tpu_custom_call.1} parent=75 // pred_check
          %p1469 = pneg %p279
        $region78: #{tpu_custom_call.1} parent=75 // pred_check_branch
          %1471 = sbr.rel (%p1469) target = $region80
        $region79: #{tpu_custom_call.1} parent=75 // pred_region
          %s1472 = sand.u32 %s264, 1
          %s1473 = scalar_lea.sflag [#allocation8], %s1472
          %s1474 = sand.u32 %s264, 1
          %s1475 = smul.addr %s1474, 8
          %s1476 = scalar_lea.vmem [#allocation9], %s1475
          %1477 = dma.done %s1473, 128
        $region80: #{tpu_custom_call.1} parent=75 // pred_fallthru
          _
      $region76: #{tpu_custom_call.1} parent=5 // pred_fallthru
        _
    $region6: #{tpu_custom_call.1} parent=1 // loop_footer
      %s25 = sadd.s32 1, %s21
    $region7: #{tpu_custom_call.1} parent=1 // loop_footer_branch
      %20 = sbr.rel target = $region3
    $region8: #{tpu_custom_call.1} parent=1 // loop_exit
      _
    %1478 = vsyncpa [#allocation7], 1
    %s1479 = scalar_lea.sflag [#allocation7], 1
    %1480 = vsyncpa %s1479, 1
    %1481 = vsyncpa [#allocation8], 1
    %s1482 = scalar_lea.sflag [#allocation8], 1
    %1483 = vsyncpa %s1482, 1

</llo_original>
